<compile_context>
chip_gen: v7x
topology: tpu7x:2x2x1
jax: 0.10.0
libtpu: 0.0.40
codegen_flags: <defaults>
</compile_context>

<pallas_src>
import math

import jax
import jax.numpy as jnp
from jax import lax
from jax.experimental import pallas as pl
from jax.experimental.pallas import tpu as pltpu

# ----------------------------- config ---------------------------------------
B = 2            # batch
N = 8            # sequence length (tokens)
C = 32           # embedding dim
NUM_HEADS = 4
HEAD_DIM = C // NUM_HEADS
MLP_RATIO = 4.0
HID = int(C * MLP_RATIO)          # 128 -> lane-dense MLP intermediate
SCALE = HEAD_DIM ** (-0.5)
LN_EPS = 1e-5
QKV_BIAS = True  # exercise the q_bias / v_bias path of Attention


# ----------------------------- kernel helpers --------------------------------
def _layer_norm(x, w, b):
    # PyTorch LayerNorm: biased variance, eps inside rsqrt.
    mean = jnp.mean(x, axis=-1, keepdims=True)
    xc = x - mean
    var = jnp.mean(xc * xc, axis=-1, keepdims=True)
    inv = lax.rsqrt(var + LN_EPS)
    return xc * inv * w + b


def _gelu_exact(x):
    # nn.GELU default = exact erf-based GELU.
    return 0.5 * x * (1.0 + lax.erf(x * (1.0 / math.sqrt(2.0))))


# ----------------------------- kernel ---------------------------------------
def block_kernel(
    x_ref,          # (B*N, C)
    vec_c_ref,      # (6, C)   rows: ln1_w, ln1_b, ln2_w, ln2_b, bproj, b2
    vec_h_ref,      # (2, HID) row0: [q_bias*SCALE | 0 | v_bias | pad], row1: b1
    wqkv_ref,       # (C, 3C)  SCALE pre-folded into the q third
    wproj_ref,      # (H, hd, C) per-head output projection (leading-axis indexed)
    w1_ref,         # (C, HID)
    w2_ref,         # (HID, C)
    out_ref,        # (B*N, C)
):
    x = x_ref[...]                                            # (BN, C)

    # static sublane-offset slices of the packed vector slabs
    ln1_w = vec_c_ref[0:1, :]
    ln1_b = vec_c_ref[1:2, :]
    ln2_w = vec_c_ref[2:3, :]
    ln2_b = vec_c_ref[3:4, :]
    bproj = vec_c_ref[4:5, :]
    b2 = vec_c_ref[5:6, :]
    bqkv = vec_h_ref[0:1, 0:3 * C]                            # (1, 3C)
    b1 = vec_h_ref[1:2, :]                                    # (1, HID)

    # ---- Attention branch ---------------------------------------------------
    h1 = _layer_norm(x, ln1_w, ln1_b)                         # (BN, C)

    # single fused qkv matmul for all heads (SCALE + q bias already folded)
    qkv = jnp.dot(h1, wqkv_ref[...],
                  preferred_element_type=jnp.float32) + bqkv  # (BN, 3C)

    attn = jnp.zeros_like(x)                                  # per-head proj accumulation
    for head in range(NUM_HEADS):                             # unrolled, NUM_HEADS=4
        q0 = head * HEAD_DIM
        k0 = C + head * HEAD_DIM
        v0 = 2 * C + head * HEAD_DIM
        # static in-vreg lane slices of the fused qkv output; leading-dim
        # reshape (BN,hd)->(B,N,hd) is a layout no-op.
        qb = qkv[:, q0:q0 + HEAD_DIM].reshape(B, N, HEAD_DIM)
        kb = qkv[:, k0:k0 + HEAD_DIM].reshape(B, N, HEAD_DIM)
        vb = qkv[:, v0:v0 + HEAD_DIM].reshape(B, N, HEAD_DIM)

        s = jnp.einsum("bqd,bkd->bqk", qb, kb,
                       preferred_element_type=jnp.float32)    # (B, N, N)
        s = s - jnp.max(s, axis=-1, keepdims=True)
        p = jnp.exp(s)
        p = p * pl.reciprocal(jnp.sum(p, axis=-1, keepdims=True), approx=True)
        ob = jnp.einsum("bqk,bkd->bqd", p, vb,
                        preferred_element_type=jnp.float32)   # (B, N, hd)

        # accumulate through the per-head slice of the output projection
        # (avoids lane-concat of head outputs)
        attn = attn + jnp.dot(ob.reshape(B * N, HEAD_DIM), wproj_ref[head],
                              preferred_element_type=jnp.float32)

    x1 = x + attn + bproj                                     # residual 1

    # ---- MLP branch (HID=128 -> lane-dense intermediate) ---------------------
    h2 = _layer_norm(x1, ln2_w, ln2_b)
    m = jnp.dot(h2, w1_ref[...], preferred_element_type=jnp.float32) + b1
    m = _gelu_exact(m)
    m = jnp.dot(m, w2_ref[...], preferred_element_type=jnp.float32) + b2

    out_ref[...] = x1 + m                                     # residual 2


# ----------------------------- wrapper ---------------------------------------
@jax.jit
def block_forward(x, params):
    (ln1_w, ln1_b, wqkv, q_bias, v_bias, wproj, bproj,
     ln2_w, ln2_b, w1, b1, w2, b2) = params

    bsz, n, c = x.shape
    x2 = x.reshape(bsz * n, c)                    # fold tokens into sublane axis

    # Fold the attention scale into the q third of the fused qkv weight + q bias
    # (free: constant-folded by XLA, removes in-kernel VALU multiplies).
    wqkv_scaled = jnp.concatenate([wqkv[:, :c] * SCALE, wqkv[:, c:]], axis=1)
    bqkv = jnp.concatenate([q_bias * SCALE, jnp.zeros((c,), jnp.float32), v_bias])

    # Pack the tiny vector operands into two slabs (fewer DMA descriptors).
    vec_c = jnp.stack([ln1_w, ln1_b, ln2_w, ln2_b, bproj, b2], axis=0)       # (6, C)
    vec_h = jnp.stack(
        [jnp.concatenate([bqkv, jnp.zeros((HID - 3 * c,), jnp.float32)]), b1],
        axis=0)                                                              # (2, HID)

    # Per-head output-projection weights on the leading axis (free reshape).
    wproj_h = wproj.reshape(NUM_HEADS, HEAD_DIM, c)

    vspec = pl.BlockSpec(memory_space=pltpu.MemorySpace.VMEM)

    out2 = pl.pallas_call(
        block_kernel,
        out_shape=jax.ShapeDtypeStruct((bsz * n, c), jnp.float32),
        in_specs=[vspec] * 7,
        out_specs=vspec,
    )(x2, vec_c, vec_h, wqkv_scaled, wproj_h, w1, w2)

    return out2.reshape(bsz, n, c)


# ----------------------------- pure-JAX reference ----------------------------
def block_reference(x, params):
    (ln1_w, ln1_b, wqkv, q_bias, v_bias, wproj, bproj,
     ln2_w, ln2_b, w1, b1, w2, b2) = params

    def ln(t, w, b):
        mean = jnp.mean(t, axis=-1, keepdims=True)
        var = jnp.mean((t - mean) ** 2, axis=-1, keepdims=True)
        return (t - mean) / jnp.sqrt(var + LN_EPS) * w + b

    h = ln(x, ln1_w, ln1_b)
    bqkv = jnp.concatenate([q_bias, jnp.zeros_like(q_bias), v_bias])
    qkv = h @ wqkv + bqkv                                        # (B, N, 3C)
    qkv = qkv.reshape(B, N, 3, NUM_HEADS, HEAD_DIM).transpose(2, 0, 3, 1, 4)
    q, k, v = qkv[0] * SCALE, qkv[1], qkv[2]                     # (B, H, N, hd)
    att = jnp.einsum("bhqd,bhkd->bhqk", q, k)
    att = jax.nn.softmax(att, axis=-1)
    o = jnp.einsum("bhqk,bhkd->bhqd", att, v)
    o = o.transpose(0, 2, 1, 3).reshape(B, N, C)
    x1 = x + o @ wproj + bproj

    h2 = ln(x1, ln2_w, ln2_b)
    m = h2 @ w1 + b1
    m = _gelu_exact(m)
    return x1 + m @ w2 + b2


# ----------------------------- main ------------------------------------------
if __name__ == "__main__":
    key = jax.random.PRNGKey(0)
    ks = jax.random.split(key, 16)

    x = jax.random.normal(ks[0], (B, N, C), jnp.float32)

    # Deterministic synthetic parameters (shapes follow Block.__init__);
    # all linear weights are PRE-TRANSPOSED to (in_features, out_features).
    ln1_w = 1.0 + 0.1 * jax.random.normal(ks[10], (C,), jnp.float32)
    ln1_b = 0.05 * jax.random.normal(ks[11], (C,), jnp.float32)
    ln2_w = 1.0 + 0.1 * jax.random.normal(ks[12], (C,), jnp.float32)
    ln2_b = 0.05 * jax.random.normal(ks[13], (C,), jnp.float32)

    wqkv = jax.random.normal(ks[1], (C, 3 * C), jnp.float32) * 0.05
    if QKV_BIAS:
        q_bias = jax.random.normal(ks[2], (C,), jnp.float32) * 0.02
        v_bias = jax.random.normal(ks[3], (C,), jnp.float32) * 0.02
    else:
        q_bias = jnp.zeros((C,), jnp.float32)
        v_bias = jnp.zeros((C,), jnp.float32)

    wproj = jax.random.normal(ks[4], (C, C), jnp.float32) * 0.05
    bproj = jax.random.normal(ks[5], (C,), jnp.float32) * 0.02

    w1 = jax.random.normal(ks[6], (C, HID), jnp.float32) * 0.05
    b1 = jax.random.normal(ks[7], (HID,), jnp.float32) * 0.02
    w2 = jax.random.normal(ks[8], (HID, C), jnp.float32) * 0.05
    b2 = jax.random.normal(ks[9], (C,), jnp.float32) * 0.02

    params = (ln1_w, ln1_b, wqkv, q_bias, v_bias, wproj, bproj,
              ln2_w, ln2_b, w1, b1, w2, b2)

    # TODO(synk): layer-scale (gamma_1/gamma_2, init_values>0), dropout and
    #             drop_path paths not exercised (identity at inference with
    #             init_values=None, matching default use).

    out = block_forward(x, params)
    jax.block_until_ready(out)

    ref = block_reference(x, params)
    # approx reciprocal in the softmax (EUP) -> slightly looser tolerance than exact f32
    max_err = float(jnp.max(jnp.abs(out - ref)))
    assert jnp.allclose(out, ref, atol=2e-3, rtol=2e-3), max_err

    print("KERNEL_OK")
</pallas_src>

<mosaic_0001>
module attributes {stable_mosaic.version = 11 : i64} {
  func.func @block_kernel(%arg0: memref<16x32xf32, #tpu.memory_space<vmem>>, %arg1: memref<6x32xf32, #tpu.memory_space<vmem>>, %arg2: memref<2x128xf32, #tpu.memory_space<vmem>>, %arg3: memref<32x96xf32, #tpu.memory_space<vmem>>, %arg4: memref<4x8x32xf32, #tpu.memory_space<vmem>>, %arg5: memref<32x128xf32, #tpu.memory_space<vmem>>, %arg6: memref<128x32xf32, #tpu.memory_space<vmem>>, %arg7: memref<16x32xf32, #tpu.memory_space<vmem>>) attributes {dimension_semantics = [], scalar_prefetch = 0 : i64, scratch_operands = 0 : i64, tpu.core_type = #tpu.core_type<tc>} {
    %c0 = arith.constant 0 : index
    %c0_0 = arith.constant 0 : index
    %0 = vector.load %arg0[%c0, %c0_0] : memref<16x32xf32, #tpu.memory_space<vmem>>, vector<16x32xf32>
    %c0_1 = arith.constant 0 : index
    %c0_2 = arith.constant 0 : index
    %1 = vector.load %arg1[%c0_1, %c0_2] : memref<6x32xf32, #tpu.memory_space<vmem>>, vector<1x32xf32>
    %c1 = arith.constant 1 : index
    %c0_3 = arith.constant 0 : index
    %2 = vector.load %arg1[%c1, %c0_3] : memref<6x32xf32, #tpu.memory_space<vmem>>, vector<1x32xf32>
    %c2 = arith.constant 2 : index
    %c0_4 = arith.constant 0 : index
    %3 = vector.load %arg1[%c2, %c0_4] : memref<6x32xf32, #tpu.memory_space<vmem>>, vector<1x32xf32>
    %c3 = arith.constant 3 : index
    %c0_5 = arith.constant 0 : index
    %4 = vector.load %arg1[%c3, %c0_5] : memref<6x32xf32, #tpu.memory_space<vmem>>, vector<1x32xf32>
    %c4 = arith.constant 4 : index
    %c0_6 = arith.constant 0 : index
    %5 = vector.load %arg1[%c4, %c0_6] : memref<6x32xf32, #tpu.memory_space<vmem>>, vector<1x32xf32>
    %c5 = arith.constant 5 : index
    %c0_7 = arith.constant 0 : index
    %6 = vector.load %arg1[%c5, %c0_7] : memref<6x32xf32, #tpu.memory_space<vmem>>, vector<1x32xf32>
    %c0_8 = arith.constant 0 : index
    %c0_9 = arith.constant 0 : index
    %7 = vector.load %arg2[%c0_8, %c0_9] : memref<2x128xf32, #tpu.memory_space<vmem>>, vector<1x96xf32>
    %c1_10 = arith.constant 1 : index
    %c0_11 = arith.constant 0 : index
    %8 = vector.load %arg2[%c1_10, %c0_11] : memref<2x128xf32, #tpu.memory_space<vmem>>, vector<1x128xf32>
    %cst = arith.constant dense<0.000000e+00> : vector<16xf32>
    %9 = vector.multi_reduction <add>, %0, %cst [1] : vector<16x32xf32> to vector<16xf32>
    %10 = vector.shape_cast %9 : vector<16xf32> to vector<16x1xf32>
    %cst_12 = arith.constant 3.200000e+01 : f32
    %11 = vector.broadcast %cst_12 : f32 to vector<16x1xf32>
    %12 = arith.divf %10, %11 : vector<16x1xf32>
    %13 = vector.broadcast %12 : vector<16x1xf32> to vector<16x32xf32>
    %14 = arith.subf %0, %13 : vector<16x32xf32>
    %15 = arith.mulf %14, %14 : vector<16x32xf32>
    %cst_13 = arith.constant dense<0.000000e+00> : vector<16xf32>
    %16 = vector.multi_reduction <add>, %15, %cst_13 [1] : vector<16x32xf32> to vector<16xf32>
    %17 = vector.shape_cast %16 : vector<16xf32> to vector<16x1xf32>
    %cst_14 = arith.constant 3.200000e+01 : f32
    %18 = vector.broadcast %cst_14 : f32 to vector<16x1xf32>
    %19 = arith.divf %17, %18 : vector<16x1xf32>
    %cst_15 = arith.constant 9.99999974E-6 : f32
    %20 = vector.broadcast %cst_15 : f32 to vector<16x1xf32>
    %21 = arith.addf %19, %20 : vector<16x1xf32>
    %22 = math.rsqrt %21 : vector<16x1xf32>
    %23 = vector.broadcast %22 : vector<16x1xf32> to vector<16x32xf32>
    %24 = arith.mulf %14, %23 : vector<16x32xf32>
    %25 = vector.broadcast %1 : vector<1x32xf32> to vector<16x32xf32>
    %26 = arith.mulf %24, %25 : vector<16x32xf32>
    %27 = vector.broadcast %2 : vector<1x32xf32> to vector<16x32xf32>
    %28 = arith.addf %26, %27 : vector<16x32xf32>
    %c0_16 = arith.constant 0 : index
    %c0_17 = arith.constant 0 : index
    %29 = vector.load %arg3[%c0_16, %c0_17] : memref<32x96xf32, #tpu.memory_space<vmem>>, vector<32x96xf32>
    %cst_18 = arith.constant dense<0.000000e+00> : vector<16x96xf32>
    %30 = tpu.matmul %28, %29, %cst_18 {dimension_numbers = #tpu.dot_dimension_numbers<[1], [0], [0], [1], [0, 0, 1, 1], [], []>} : vector<16x32xf32>, vector<32x96xf32>, vector<16x96xf32> -> vector<16x96xf32>
    %31 = vector.broadcast %7 : vector<1x96xf32> to vector<16x96xf32>
    %32 = arith.addf %30, %31 : vector<16x96xf32>
    %cst_19 = arith.constant 0.000000e+00 : f32
    %33 = vector.broadcast %cst_19 : f32 to vector<16x32xf32>
    %34 = vector.extract_strided_slice %32 {offsets = [0, 0], sizes = [16, 8], strides = [1, 1]} : vector<16x96xf32> to vector<16x8xf32>
    %35 = vector.shape_cast %34 : vector<16x8xf32> to vector<2x8x8xf32>
    %36 = vector.extract_strided_slice %32 {offsets = [0, 32], sizes = [16, 8], strides = [1, 1]} : vector<16x96xf32> to vector<16x8xf32>
    %37 = vector.shape_cast %36 : vector<16x8xf32> to vector<2x8x8xf32>
    %38 = vector.extract_strided_slice %32 {offsets = [0, 64], sizes = [16, 8], strides = [1, 1]} : vector<16x96xf32> to vector<16x8xf32>
    %39 = vector.shape_cast %38 : vector<16x8xf32> to vector<2x8x8xf32>
    "tpu.trace_start"() <{level = 10 : i32, message = "bqd,bkd->bqk"}> : () -> ()
    %cst_20 = arith.constant dense<0.000000e+00> : vector<2x8x8xf32>
    %40 = tpu.matmul %35, %37, %cst_20 {dimension_numbers = #tpu.dot_dimension_numbers<[2], [2], [1], [1], [0, 0, 0, 1, 1, 1], [0], [0]>} : vector<2x8x8xf32>, vector<2x8x8xf32>, vector<2x8x8xf32> -> vector<2x8x8xf32>
    "tpu.trace_stop"() : () -> ()
    %cst_21 = arith.constant dense<0xFF800000> : vector<2x8xf32>
    %41 = vector.multi_reduction <maximumf>, %40, %cst_21 [2] : vector<2x8x8xf32> to vector<2x8xf32>
    %42 = vector.shape_cast %41 : vector<2x8xf32> to vector<2x8x1xf32>
    %43 = vector.broadcast %42 : vector<2x8x1xf32> to vector<2x8x8xf32>
    %44 = arith.subf %40, %43 : vector<2x8x8xf32>
    %45 = math.exp %44 : vector<2x8x8xf32>
    %cst_22 = arith.constant dense<0.000000e+00> : vector<2x8xf32>
    %46 = vector.multi_reduction <add>, %45, %cst_22 [2] : vector<2x8x8xf32> to vector<2x8xf32>
    %47 = vector.shape_cast %46 : vector<2x8xf32> to vector<2x8x1xf32>
    %48 = tpu.reciprocal %47 {approx = true} : vector<2x8x1xf32> -> vector<2x8x1xf32>
    %49 = vector.broadcast %48 : vector<2x8x1xf32> to vector<2x8x8xf32>
    %50 = arith.mulf %45, %49 : vector<2x8x8xf32>
    "tpu.trace_start"() <{level = 10 : i32, message = "bqk,bkd->bqd"}> : () -> ()
    %cst_23 = arith.constant dense<0.000000e+00> : vector<2x8x8xf32>
    %51 = tpu.matmul %50, %39, %cst_23 {dimension_numbers = #tpu.dot_dimension_numbers<[2], [1], [1], [2], [0, 0, 0, 1, 1, 2], [0], [0]>} : vector<2x8x8xf32>, vector<2x8x8xf32>, vector<2x8x8xf32> -> vector<2x8x8xf32>
    "tpu.trace_stop"() : () -> ()
    %52 = vector.shape_cast %51 : vector<2x8x8xf32> to vector<16x8xf32>
    %c0_24 = arith.constant 0 : index
    %c0_25 = arith.constant 0 : index
    %c0_26 = arith.constant 0 : index
    %53 = vector.load %arg4[%c0_24, %c0_25, %c0_26] : memref<4x8x32xf32, #tpu.memory_space<vmem>>, vector<1x8x32xf32>
    %54 = vector.shape_cast %53 : vector<1x8x32xf32> to vector<8x32xf32>
    %cst_27 = arith.constant dense<0.000000e+00> : vector<16x32xf32>
    %55 = tpu.matmul %52, %54, %cst_27 {dimension_numbers = #tpu.dot_dimension_numbers<[1], [0], [0], [1], [0, 0, 1, 1], [], []>} : vector<16x8xf32>, vector<8x32xf32>, vector<16x32xf32> -> vector<16x32xf32>
    %56 = arith.addf %33, %55 : vector<16x32xf32>
    %57 = vector.extract_strided_slice %32 {offsets = [0, 8], sizes = [16, 8], strides = [1, 1]} : vector<16x96xf32> to vector<16x8xf32>
    %58 = vector.shape_cast %57 : vector<16x8xf32> to vector<2x8x8xf32>
    %59 = vector.extract_strided_slice %32 {offsets = [0, 40], sizes = [16, 8], strides = [1, 1]} : vector<16x96xf32> to vector<16x8xf32>
    %60 = vector.shape_cast %59 : vector<16x8xf32> to vector<2x8x8xf32>
    %61 = vector.extract_strided_slice %32 {offsets = [0, 72], sizes = [16, 8], strides = [1, 1]} : vector<16x96xf32> to vector<16x8xf32>
    %62 = vector.shape_cast %61 : vector<16x8xf32> to vector<2x8x8xf32>
    "tpu.trace_start"() <{level = 10 : i32, message = "bqd,bkd->bqk"}> : () -> ()
    %cst_28 = arith.constant dense<0.000000e+00> : vector<2x8x8xf32>
    %63 = tpu.matmul %58, %60, %cst_28 {dimension_numbers = #tpu.dot_dimension_numbers<[2], [2], [1], [1], [0, 0, 0, 1, 1, 1], [0], [0]>} : vector<2x8x8xf32>, vector<2x8x8xf32>, vector<2x8x8xf32> -> vector<2x8x8xf32>
    "tpu.trace_stop"() : () -> ()
    %cst_29 = arith.constant dense<0xFF800000> : vector<2x8xf32>
    %64 = vector.multi_reduction <maximumf>, %63, %cst_29 [2] : vector<2x8x8xf32> to vector<2x8xf32>
    %65 = vector.shape_cast %64 : vector<2x8xf32> to vector<2x8x1xf32>
    %66 = vector.broadcast %65 : vector<2x8x1xf32> to vector<2x8x8xf32>
    %67 = arith.subf %63, %66 : vector<2x8x8xf32>
    %68 = math.exp %67 : vector<2x8x8xf32>
    %cst_30 = arith.constant dense<0.000000e+00> : vector<2x8xf32>
    %69 = vector.multi_reduction <add>, %68, %cst_30 [2] : vector<2x8x8xf32> to vector<2x8xf32>
    %70 = vector.shape_cast %69 : vector<2x8xf32> to vector<2x8x1xf32>
    %71 = tpu.reciprocal %70 {approx = true} : vector<2x8x1xf32> -> vector<2x8x1xf32>
    %72 = vector.broadcast %71 : vector<2x8x1xf32> to vector<2x8x8xf32>
    %73 = arith.mulf %68, %72 : vector<2x8x8xf32>
    "tpu.trace_start"() <{level = 10 : i32, message = "bqk,bkd->bqd"}> : () -> ()
    %cst_31 = arith.constant dense<0.000000e+00> : vector<2x8x8xf32>
    %74 = tpu.matmul %73, %62, %cst_31 {dimension_numbers = #tpu.dot_dimension_numbers<[2], [1], [1], [2], [0, 0, 0, 1, 1, 2], [0], [0]>} : vector<2x8x8xf32>, vector<2x8x8xf32>, vector<2x8x8xf32> -> vector<2x8x8xf32>
    "tpu.trace_stop"() : () -> ()
    %75 = vector.shape_cast %74 : vector<2x8x8xf32> to vector<16x8xf32>
    %c1_32 = arith.constant 1 : index
    %c0_33 = arith.constant 0 : index
    %c0_34 = arith.constant 0 : index
    %76 = vector.load %arg4[%c1_32, %c0_33, %c0_34] : memref<4x8x32xf32, #tpu.memory_space<vmem>>, vector<1x8x32xf32>
    %77 = vector.shape_cast %76 : vector<1x8x32xf32> to vector<8x32xf32>
    %cst_35 = arith.constant dense<0.000000e+00> : vector<16x32xf32>
    %78 = tpu.matmul %75, %77, %cst_35 {dimension_numbers = #tpu.dot_dimension_numbers<[1], [0], [0], [1], [0, 0, 1, 1], [], []>} : vector<16x8xf32>, vector<8x32xf32>, vector<16x32xf32> -> vector<16x32xf32>
    %79 = arith.addf %56, %78 : vector<16x32xf32>
    %80 = vector.extract_strided_slice %32 {offsets = [0, 16], sizes = [16, 8], strides = [1, 1]} : vector<16x96xf32> to vector<16x8xf32>
    %81 = vector.shape_cast %80 : vector<16x8xf32> to vector<2x8x8xf32>
    %82 = vector.extract_strided_slice %32 {offsets = [0, 48], sizes = [16, 8], strides = [1, 1]} : vector<16x96xf32> to vector<16x8xf32>
    %83 = vector.shape_cast %82 : vector<16x8xf32> to vector<2x8x8xf32>
    %84 = vector.extract_strided_slice %32 {offsets = [0, 80], sizes = [16, 8], strides = [1, 1]} : vector<16x96xf32> to vector<16x8xf32>
    %85 = vector.shape_cast %84 : vector<16x8xf32> to vector<2x8x8xf32>
    "tpu.trace_start"() <{level = 10 : i32, message = "bqd,bkd->bqk"}> : () -> ()
    %cst_36 = arith.constant dense<0.000000e+00> : vector<2x8x8xf32>
    %86 = tpu.matmul %81, %83, %cst_36 {dimension_numbers = #tpu.dot_dimension_numbers<[2], [2], [1], [1], [0, 0, 0, 1, 1, 1], [0], [0]>} : vector<2x8x8xf32>, vector<2x8x8xf32>, vector<2x8x8xf32> -> vector<2x8x8xf32>
    "tpu.trace_stop"() : () -> ()
    %cst_37 = arith.constant dense<0xFF800000> : vector<2x8xf32>
    %87 = vector.multi_reduction <maximumf>, %86, %cst_37 [2] : vector<2x8x8xf32> to vector<2x8xf32>
    %88 = vector.shape_cast %87 : vector<2x8xf32> to vector<2x8x1xf32>
    %89 = vector.broadcast %88 : vector<2x8x1xf32> to vector<2x8x8xf32>
    %90 = arith.subf %86, %89 : vector<2x8x8xf32>
    %91 = math.exp %90 : vector<2x8x8xf32>
    %cst_38 = arith.constant dense<0.000000e+00> : vector<2x8xf32>
    %92 = vector.multi_reduction <add>, %91, %cst_38 [2] : vector<2x8x8xf32> to vector<2x8xf32>
    %93 = vector.shape_cast %92 : vector<2x8xf32> to vector<2x8x1xf32>
    %94 = tpu.reciprocal %93 {approx = true} : vector<2x8x1xf32> -> vector<2x8x1xf32>
    %95 = vector.broadcast %94 : vector<2x8x1xf32> to vector<2x8x8xf32>
    %96 = arith.mulf %91, %95 : vector<2x8x8xf32>
    "tpu.trace_start"() <{level = 10 : i32, message = "bqk,bkd->bqd"}> : () -> ()
    %cst_39 = arith.constant dense<0.000000e+00> : vector<2x8x8xf32>
    %97 = tpu.matmul %96, %85, %cst_39 {dimension_numbers = #tpu.dot_dimension_numbers<[2], [1], [1], [2], [0, 0, 0, 1, 1, 2], [0], [0]>} : vector<2x8x8xf32>, vector<2x8x8xf32>, vector<2x8x8xf32> -> vector<2x8x8xf32>
    "tpu.trace_stop"() : () -> ()
    %98 = vector.shape_cast %97 : vector<2x8x8xf32> to vector<16x8xf32>
    %c2_40 = arith.constant 2 : index
    %c0_41 = arith.constant 0 : index
    %c0_42 = arith.constant 0 : index
    %99 = vector.load %arg4[%c2_40, %c0_41, %c0_42] : memref<4x8x32xf32, #tpu.memory_space<vmem>>, vector<1x8x32xf32>
    %100 = vector.shape_cast %99 : vector<1x8x32xf32> to vector<8x32xf32>
    %cst_43 = arith.constant dense<0.000000e+00> : vector<16x32xf32>
    %101 = tpu.matmul %98, %100, %cst_43 {dimension_numbers = #tpu.dot_dimension_numbers<[1], [0], [0], [1], [0, 0, 1, 1], [], []>} : vector<16x8xf32>, vector<8x32xf32>, vector<16x32xf32> -> vector<16x32xf32>
    %102 = arith.addf %79, %101 : vector<16x32xf32>
    %103 = vector.extract_strided_slice %32 {offsets = [0, 24], sizes = [16, 8], strides = [1, 1]} : vector<16x96xf32> to vector<16x8xf32>
    %104 = vector.shape_cast %103 : vector<16x8xf32> to vector<2x8x8xf32>
    %105 = vector.extract_strided_slice %32 {offsets = [0, 56], sizes = [16, 8], strides = [1, 1]} : vector<16x96xf32> to vector<16x8xf32>
    %106 = vector.shape_cast %105 : vector<16x8xf32> to vector<2x8x8xf32>
    %107 = vector.extract_strided_slice %32 {offsets = [0, 88], sizes = [16, 8], strides = [1, 1]} : vector<16x96xf32> to vector<16x8xf32>
    %108 = vector.shape_cast %107 : vector<16x8xf32> to vector<2x8x8xf32>
    "tpu.trace_start"() <{level = 10 : i32, message = "bqd,bkd->bqk"}> : () -> ()
    %cst_44 = arith.constant dense<0.000000e+00> : vector<2x8x8xf32>
    %109 = tpu.matmul %104, %106, %cst_44 {dimension_numbers = #tpu.dot_dimension_numbers<[2], [2], [1], [1], [0, 0, 0, 1, 1, 1], [0], [0]>} : vector<2x8x8xf32>, vector<2x8x8xf32>, vector<2x8x8xf32> -> vector<2x8x8xf32>
    "tpu.trace_stop"() : () -> ()
    %cst_45 = arith.constant dense<0xFF800000> : vector<2x8xf32>
    %110 = vector.multi_reduction <maximumf>, %109, %cst_45 [2] : vector<2x8x8xf32> to vector<2x8xf32>
    %111 = vector.shape_cast %110 : vector<2x8xf32> to vector<2x8x1xf32>
    %112 = vector.broadcast %111 : vector<2x8x1xf32> to vector<2x8x8xf32>
    %113 = arith.subf %109, %112 : vector<2x8x8xf32>
    %114 = math.exp %113 : vector<2x8x8xf32>
    %cst_46 = arith.constant dense<0.000000e+00> : vector<2x8xf32>
    %115 = vector.multi_reduction <add>, %114, %cst_46 [2] : vector<2x8x8xf32> to vector<2x8xf32>
    %116 = vector.shape_cast %115 : vector<2x8xf32> to vector<2x8x1xf32>
    %117 = tpu.reciprocal %116 {approx = true} : vector<2x8x1xf32> -> vector<2x8x1xf32>
    %118 = vector.broadcast %117 : vector<2x8x1xf32> to vector<2x8x8xf32>
    %119 = arith.mulf %114, %118 : vector<2x8x8xf32>
    "tpu.trace_start"() <{level = 10 : i32, message = "bqk,bkd->bqd"}> : () -> ()
    %cst_47 = arith.constant dense<0.000000e+00> : vector<2x8x8xf32>
    %120 = tpu.matmul %119, %108, %cst_47 {dimension_numbers = #tpu.dot_dimension_numbers<[2], [1], [1], [2], [0, 0, 0, 1, 1, 2], [0], [0]>} : vector<2x8x8xf32>, vector<2x8x8xf32>, vector<2x8x8xf32> -> vector<2x8x8xf32>
    "tpu.trace_stop"() : () -> ()
    %121 = vector.shape_cast %120 : vector<2x8x8xf32> to vector<16x8xf32>
    %c3_48 = arith.constant 3 : index
    %c0_49 = arith.constant 0 : index
    %c0_50 = arith.constant 0 : index
    %122 = vector.load %arg4[%c3_48, %c0_49, %c0_50] : memref<4x8x32xf32, #tpu.memory_space<vmem>>, vector<1x8x32xf32>
    %123 = vector.shape_cast %122 : vector<1x8x32xf32> to vector<8x32xf32>
    %cst_51 = arith.constant dense<0.000000e+00> : vector<16x32xf32>
    %124 = tpu.matmul %121, %123, %cst_51 {dimension_numbers = #tpu.dot_dimension_numbers<[1], [0], [0], [1], [0, 0, 1, 1], [], []>} : vector<16x8xf32>, vector<8x32xf32>, vector<16x32xf32> -> vector<16x32xf32>
    %125 = arith.addf %102, %124 : vector<16x32xf32>
    %126 = arith.addf %0, %125 : vector<16x32xf32>
    %127 = vector.broadcast %5 : vector<1x32xf32> to vector<16x32xf32>
    %128 = arith.addf %126, %127 : vector<16x32xf32>
    %cst_52 = arith.constant dense<0.000000e+00> : vector<16xf32>
    %129 = vector.multi_reduction <add>, %128, %cst_52 [1] : vector<16x32xf32> to vector<16xf32>
    %130 = vector.shape_cast %129 : vector<16xf32> to vector<16x1xf32>
    %cst_53 = arith.constant 3.200000e+01 : f32
    %131 = vector.broadcast %cst_53 : f32 to vector<16x1xf32>
    %132 = arith.divf %130, %131 : vector<16x1xf32>
    %133 = vector.broadcast %132 : vector<16x1xf32> to vector<16x32xf32>
    %134 = arith.subf %128, %133 : vector<16x32xf32>
    %135 = arith.mulf %134, %134 : vector<16x32xf32>
    %cst_54 = arith.constant dense<0.000000e+00> : vector<16xf32>
    %136 = vector.multi_reduction <add>, %135, %cst_54 [1] : vector<16x32xf32> to vector<16xf32>
    %137 = vector.shape_cast %136 : vector<16xf32> to vector<16x1xf32>
    %cst_55 = arith.constant 3.200000e+01 : f32
    %138 = vector.broadcast %cst_55 : f32 to vector<16x1xf32>
    %139 = arith.divf %137, %138 : vector<16x1xf32>
    %cst_56 = arith.constant 9.99999974E-6 : f32
    %140 = vector.broadcast %cst_56 : f32 to vector<16x1xf32>
    %141 = arith.addf %139, %140 : vector<16x1xf32>
    %142 = math.rsqrt %141 : vector<16x1xf32>
    %143 = vector.broadcast %142 : vector<16x1xf32> to vector<16x32xf32>
    %144 = arith.mulf %134, %143 : vector<16x32xf32>
    %145 = vector.broadcast %3 : vector<1x32xf32> to vector<16x32xf32>
    %146 = arith.mulf %144, %145 : vector<16x32xf32>
    %147 = vector.broadcast %4 : vector<1x32xf32> to vector<16x32xf32>
    %148 = arith.addf %146, %147 : vector<16x32xf32>
    %c0_57 = arith.constant 0 : index
    %c0_58 = arith.constant 0 : index
    %149 = vector.load %arg5[%c0_57, %c0_58] : memref<32x128xf32, #tpu.memory_space<vmem>>, vector<32x128xf32>
    %cst_59 = arith.constant dense<0.000000e+00> : vector<16x128xf32>
    %150 = tpu.matmul %148, %149, %cst_59 {dimension_numbers = #tpu.dot_dimension_numbers<[1], [0], [0], [1], [0, 0, 1, 1], [], []>} : vector<16x32xf32>, vector<32x128xf32>, vector<16x128xf32> -> vector<16x128xf32>
    %151 = vector.broadcast %8 : vector<1x128xf32> to vector<16x128xf32>
    %152 = arith.addf %150, %151 : vector<16x128xf32>
    %cst_60 = arith.constant 5.000000e-01 : f32
    %153 = vector.broadcast %cst_60 : f32 to vector<16x128xf32>
    %154 = arith.mulf %153, %152 : vector<16x128xf32>
    %cst_61 = arith.constant 0.707106769 : f32
    %155 = vector.broadcast %cst_61 : f32 to vector<16x128xf32>
    %156 = arith.mulf %152, %155 : vector<16x128xf32>
    %157 = math.erf %156 : vector<16x128xf32>
    %cst_62 = arith.constant 1.000000e+00 : f32
    %158 = vector.broadcast %cst_62 : f32 to vector<16x128xf32>
    %159 = arith.addf %158, %157 : vector<16x128xf32>
    %160 = arith.mulf %154, %159 : vector<16x128xf32>
    %c0_63 = arith.constant 0 : index
    %c0_64 = arith.constant 0 : index
    %161 = vector.load %arg6[%c0_63, %c0_64] : memref<128x32xf32, #tpu.memory_space<vmem>>, vector<128x32xf32>
    %cst_65 = arith.constant dense<0.000000e+00> : vector<16x32xf32>
    %162 = tpu.matmul %160, %161, %cst_65 {dimension_numbers = #tpu.dot_dimension_numbers<[1], [0], [0], [1], [0, 0, 1, 1], [], []>} : vector<16x128xf32>, vector<128x32xf32>, vector<16x32xf32> -> vector<16x32xf32>
    %163 = vector.broadcast %6 : vector<1x32xf32> to vector<16x32xf32>
    %164 = arith.addf %162, %163 : vector<16x32xf32>
    %165 = arith.addf %128, %164 : vector<16x32xf32>
    %c0_66 = arith.constant 0 : index
    %c0_67 = arith.constant 0 : index
    %166 = vector.load %arg7[%c0_66, %c0_67] : memref<16x32xf32, #tpu.memory_space<vmem>>, vector<16x32xf32>
    tpu.vector_store %arg7[%c0_66, %c0_67], %165 {strides = array<i32>} : memref<16x32xf32, #tpu.memory_space<vmem>>, vector<16x32xf32>,
    return
  }
}

</mosaic_0001>

<llo_original>
// kernel: block_forward.1
$region0: #{block_forward.1}
  #allocation0 [shape = 'u32[]', space=smem, size = 0x4, offset = 0x4, fixed_abs, tag = 'smem constant byte address 0x4 - core index']
  #allocation1 [shape = 'u32[144,128]{1,0:T(1,128)}', space=vmem, size = 0x12000, scoped, tag = 'internal scratch']
  %s0 = inlined_call_operand.vmem [shape: f32[16,32], index: 0, kind: input, shape index: {}]
  %s1 = inlined_call_operand.vmem [shape: f32[6,32], index: 1, kind: input, shape index: {}]
  %s2 = inlined_call_operand.vmem [shape: f32[2,128], index: 2, kind: input, shape index: {}]
  %s3 = inlined_call_operand.vmem [shape: f32[32,96], index: 3, kind: input, shape index: {}]
  %s4 = inlined_call_operand.vmem [shape: f32[4,8,32], index: 4, kind: input, shape index: {}]
  %s5 = inlined_call_operand.vmem [shape: f32[32,128], index: 5, kind: input, shape index: {}]
  %s6 = inlined_call_operand.vmem [shape: f32[128,32], index: 6, kind: input, shape index: {}]
  %s7 = inlined_call_operand.hbm [shape: f32[16,32], index: 7, kind: output, shape index: {}]
  %s8 = sld [smem:[#allocation0]]
  $region38: #{block_forward.1} parent=0
    _
  %s10 = ssub.s32 1, %s8
  %s11 = scalar_select 0, %s10, %s8
  $region1: #{block_forward.1} parent=0
    #allocation2 [shape = 'u8[8192]{0}', space=vmem, size = 0x2000, scoped, tag = 'output window, operand 0, single buffered']
    #allocation3 [shape = 's32[1]{0}', space=sflag, size = 0x4, scoped, tag = 'scoped memory for block_forward.1']
    %12 = vsyncpa [#allocation3], 0
    // Predicated region
    $region2: #{block_forward.1} parent=1 // pred_check
      _
    $region3: #{block_forward.1} parent=1 // pred_check_branch
      %14 = sbr.rel (0) target = $region5
    $region4: #{block_forward.1} parent=1 // pred_region
      _
    $region5: #{block_forward.1} parent=1 // pred_fallthru
      _
    // Predicated region
    $region6: #{block_forward.1} parent=1 // pred_check
      _
    $region7: #{block_forward.1} parent=1 // pred_check_branch
      %16 = sbr.rel (0) target = $region9
    $region8: #{block_forward.1} parent=1 // pred_region
      _
    $region9: #{block_forward.1} parent=1 // pred_fallthru
      _
    // Predicated region
    $region10: #{block_forward.1} parent=1 // pred_check
      _
    $region11: #{block_forward.1} parent=1 // pred_check_branch
      %18 = sbr.rel (0) target = $region13
    $region12: #{block_forward.1} parent=1 // pred_region
      _
    $region13: #{block_forward.1} parent=1 // pred_fallthru
      _
    // Predicated region
    $region14: #{block_forward.1} parent=1 // pred_check
      _
    $region15: #{block_forward.1} parent=1 // pred_check_branch
      %20 = sbr.rel (0) target = $region17
    $region16: #{block_forward.1} parent=1 // pred_region
      _
    $region17: #{block_forward.1} parent=1 // pred_fallthru
      _
    // Predicated region
    $region18: #{block_forward.1} parent=1 // pred_check
      _
    $region19: #{block_forward.1} parent=1 // pred_check_branch
      %22 = sbr.rel (0) target = $region21
    $region20: #{block_forward.1} parent=1 // pred_region
      _
    $region21: #{block_forward.1} parent=1 // pred_fallthru
      _
    // Predicated region
    $region22: #{block_forward.1} parent=1 // pred_check
      _
    $region23: #{block_forward.1} parent=1 // pred_check_branch
      %24 = sbr.rel (0) target = $region25
    $region24: #{block_forward.1} parent=1 // pred_region
      _
    $region25: #{block_forward.1} parent=1 // pred_fallthru
      _
    // Predicated region
    $region26: #{block_forward.1} parent=1 // pred_check
      _
    $region27: #{block_forward.1} parent=1 // pred_check_branch
      %26 = sbr.rel (0) target = $region29
    $region28: #{block_forward.1} parent=1 // pred_region
      _
    $region29: #{block_forward.1} parent=1 // pred_fallthru
      _
    %v27 = vld [vmem:[%s0] sm:$0xff]
    %v28 = vld [vmem:[%s0 + $0x8] sm:$0xff]
    %v29 = vld [vmem:[%s1] sm:$0x1]
    %v30 = vld [vmem:[%s1 + $0x1] sm:$0x1]
    %v31 = vld [vmem:[%s1 + $0x2] sm:$0x1]
    %v32 = vld [vmem:[%s1 + $0x3] sm:$0x1]
    %v33 = vld [vmem:[%s1 + $0x4] sm:$0x1]
    %v34 = vld [vmem:[%s1 + $0x5] sm:$0x1]
    %v35 = vld [vmem:[%s2] sm:$0x1]
    %v36 = vld [vmem:[%s2 + $0x1] sm:$0x1]
    %vm37 = vcmask 261120
    %v38 = vsel %vm37, %v27, 0.0
    %39 = vadd.xlane.f32.xlu0 %v38
    %v40 = vpop.xlane.xlu0 %39
    %v41 = vsel %vm37, %v28, 0.0
    %42 = vadd.xlane.f32.xlu0 %v41
    %v43 = vpop.xlane.xlu0 %42
    %v44 = vrcp.pop 32.0
    %v45 = vmul.f32 %v40, %v44
    %v46 = vmul.f32 %v43, %v44
    %v47 = vsub.f32 %v27, %v45
    %v48 = vsub.f32 %v28, %v46
    %v49 = vmul.f32 %v47, %v47
    %v50 = vmul.f32 %v48, %v48
    %v51 = vsel %vm37, %v49, 0.0
    %52 = vadd.xlane.f32.xlu0 %v51
    %v53 = vpop.xlane.xlu0 %52
    %v54 = vsel %vm37, %v50, 0.0
    %55 = vadd.xlane.f32.xlu0 %v54
    %v56 = vpop.xlane.xlu0 %55
    %v57 = vmul.f32 %v53, %v44
    %v58 = vmul.f32 %v56, %v44
    %v59 = vadd.f32 %v57, 1e-05
    %v60 = vadd.f32 %v58, 1e-05
    %v61 = vrsqrt.pop %v59
    %v62 = vrsqrt.pop %v60
    %v63 = vmul.f32 %v47, %v61
    %v64 = vmul.f32 %v48, %v62
    %v65 = vlaneseq
    %v66 = vshrl.u32 %v65, 7
    %v67 = vsub.s32 0, %v66
    %v68 = vrot.slane %v29, %v67
    %v69 = vmul.f32 %v63, %v68
    %v70 = vmul.f32 %v64, %v68
    %v71 = vlaneseq
    %v72 = vshrl.u32 %v71, 7
    %v73 = vsub.s32 0, %v72
    %v74 = vrot.slane %v30, %v73
    %v75 = vadd.f32 %v69, %v74
    %v76 = vadd.f32 %v70, %v74
    %v77 = vld [vmem:[%s3] sm:$0xff]
    %v78 = vld [vmem:[%s3 + $0x8] sm:$0xff]
    %v79 = vld [vmem:[%s3 + $0x10] sm:$0xff]
    %v80 = vld [vmem:[%s3 + $0x18] sm:$0xff]
    %v81 = vlaneseq
    %v82 = vshrl.u32 %v81, 7
    %v83 = vsub.s32 0, %v82
    %v84 = vrot.slane %v35, %v83
    %v86 = vsel %vm37, %v75, 0
    %v89 = vsel %vm37, %v76, 0
    %91 = vmatprep.subr.mxu0 0.0
    %92 = vmatpush1.msra.mxu0 %v77
    %93 = vmatprep.subr.mxu0 0.0
    %94 = vmatpush1.msra.mxu0 %v78
    %95 = vmatprep.subr.mxu0 0.0
    %96 = vmatpush1.msra.mxu0 %v79
    %97 = vmatprep.subr.mxu0 0.0
    %98 = vmatpush1.msra.mxu0 %v80
    %99 = vmatprep.subr.mxu0 0.0
    %100 = vmatpush1.msra.mxu0 0.0
    %101 = vmatprep.subr.mxu0 0.0
    %102 = vmatpush1.msra.mxu0 0.0
    %103 = vmatprep.subr.mxu0 0.0
    %104 = vmatpush1.msra.mxu0 0.0
    %105 = vmatprep.subr.mxu0 0.0
    %106 = vmatpush1.msra.mxu0 0.0
    %107 = vmatprep.subr.mxu0 0.0
    %108 = vmatpush1.msra.mxu0 0.0
    %109 = vmatprep.subr.mxu0 0.0
    %110 = vmatpush1.msra.mxu0 0.0
    %111 = vmatprep.subr.mxu0 0.0
    %112 = vmatpush1.msra.mxu0 0.0
    %113 = vmatprep.subr.mxu0 0.0
    %114 = vmatpush1.msra.mxu0 0.0
    %115 = vmatprep.subr.mxu0 0.0
    %116 = vmatpush1.msra.mxu0 0.0
    %117 = vmatprep.subr.mxu0 0.0
    %118 = vmatpush1.msra.mxu0 0.0
    %119 = vmatprep.subr.mxu0 0.0
    %120 = vmatpush1.msra.mxu0 0.0
    %121 = vmatprep.subr.mxu0 0.0
    %122 = vmatpush1.msra.mxu0 0.0
    %123 = vmatprep.subr.mxu0 0.0
    %124 = vmatpush1.msra.mxu0 0.0
    %125 = vmatprep.subr.mxu0 0.0
    %126 = vmatpush1.msra.mxu0 0.0
    %127 = vmatprep.subr.mxu0 0.0
    %128 = vmatpush1.msra.mxu0 0.0
    %129 = vmatprep.subr.mxu0 0.0
    %130 = vmatpush1.msra.mxu0 0.0
    %131 = vmatprep.subr.mxu0 0.0
    %132 = vmatpush1.msra.mxu0 0.0
    %133 = vmatprep.subr.mxu0 0.0
    %134 = vmatpush1.msra.mxu0 0.0
    %135 = vmatprep.subr.mxu0 0.0
    %136 = vmatpush1.msra.mxu0 0.0
    %137 = vmatprep.subr.mxu0 0.0
    %138 = vmatpush1.msra.mxu0 0.0
    %139 = vmatprep.subr.mxu0 0.0
    %140 = vmatpush1.msra.mxu0 0.0
    %141 = vmatprep.subr.mxu0 0.0
    %142 = vmatpush1.msra.mxu0 0.0
    %143 = vmatprep.subr.mxu0 0.0
    %144 = vmatpush1.msra.mxu0 0.0
    %145 = vmatprep.subr.mxu0 0.0
    %146 = vmatpush1.msra.mxu0 0.0
    %147 = vmatprep.subr.mxu0 0.0
    %148 = vmatpush1.msra.mxu0 0.0
    %149 = vmatprep.subr.mxu0 0.0
    %150 = vmatpush1.msra.mxu0 0.0
    %151 = vmatprep.subr.mxu0 0.0
    %152 = vmatpush1.msra.mxu0 0.0
    %153 = vmatprep.subr.mxu0 0.0
    %154 = vmatpush1.msra.mxu0 0.0
    %155 = vmatprep.mubr.f32.mxu0 0.0
    %156 = vmatmul.mubr.f32.gmra.mrb[0].mxu0 %v86
    %v157 = vpop.f32.mrb[0].mxu0
    %v158 = vadd.f32 %v84, %v157
    %v159 = vpop.f32.mrb[0].mxu0
    %160 = vmatprep.mubr.f32.mxu0 0.0
    %161 = vmatmul.mubr.f32.gmra.mrb[0].mxu0 %v89
    %v162 = vpop.f32.mrb[0].mxu0
    %v163 = vadd.f32 %v84, %v162
    %v164 = vpop.f32.mrb[0].mxu0
    %165 = vdwg.mxu0
    %167 = vrot.lane.b32.xlu0 %v158, 96
    %v168 = vpop.permute.xlu0 %167
    %vm169 = vcmask 64512
    %v170 = vsel %vm169, %v158, 0
    %v172 = vsel %vm169, %v168, 0
    %174 = vmatprep.subr.mxu0 0.0
    %175 = vmatpush1.xpose.msra.mxu0 %v172
    %176 = vmatprep.subr.mxu0 0.0
    %177 = vmatpush1.xpose.msra.mxu0 0.0
    %178 = vmatprep.subr.mxu0 0.0
    %179 = vmatpush1.xpose.msra.mxu0 0.0
    %180 = vmatprep.subr.mxu0 0.0
    %181 = vmatpush1.xpose.msra.mxu0 0.0
    %182 = vmatprep.subr.mxu0 0.0
    %183 = vmatpush1.xpose.msra.mxu0 0.0
    %184 = vmatprep.subr.mxu0 0.0
    %185 = vmatpush1.xpose.msra.mxu0 0.0
    %186 = vmatprep.subr.mxu0 0.0
    %187 = vmatpush1.xpose.msra.mxu0 0.0
    %188 = vmatprep.subr.mxu0 0.0
    %189 = vmatpush1.xpose.msra.mxu0 0.0
    %190 = vmatprep.subr.mxu0 0.0
    %191 = vmatpush1.xpose.msra.mxu0 0.0
    %192 = vmatprep.subr.mxu0 0.0
    %193 = vmatpush1.xpose.msra.mxu0 0.0
    %194 = vmatprep.subr.mxu0 0.0
    %195 = vmatpush1.xpose.msra.mxu0 0.0
    %196 = vmatprep.subr.mxu0 0.0
    %197 = vmatpush1.xpose.msra.mxu0 0.0
    %198 = vmatprep.subr.mxu0 0.0
    %199 = vmatpush1.xpose.msra.mxu0 0.0
    %200 = vmatprep.subr.mxu0 0.0
    %201 = vmatpush1.xpose.msra.mxu0 0.0
    %202 = vmatprep.subr.mxu0 0.0
    %203 = vmatpush1.xpose.msra.mxu0 0.0
    %204 = vmatprep.subr.mxu0 0.0
    %205 = vmatpush1.xpose.msra.mxu0 0.0
    %206 = vmatprep.subr.mxu0 0.0
    %207 = vmatpush1.xpose.msra.mxu0 0.0
    %208 = vmatprep.subr.mxu0 0.0
    %209 = vmatpush1.xpose.msra.mxu0 0.0
    %210 = vmatprep.subr.mxu0 0.0
    %211 = vmatpush1.xpose.msra.mxu0 0.0
    %212 = vmatprep.subr.mxu0 0.0
    %213 = vmatpush1.xpose.msra.mxu0 0.0
    %214 = vmatprep.subr.mxu0 0.0
    %215 = vmatpush1.xpose.msra.mxu0 0.0
    %216 = vmatprep.subr.mxu0 0.0
    %217 = vmatpush1.xpose.msra.mxu0 0.0
    %218 = vmatprep.subr.mxu0 0.0
    %219 = vmatpush1.xpose.msra.mxu0 0.0
    %220 = vmatprep.subr.mxu0 0.0
    %221 = vmatpush1.xpose.msra.mxu0 0.0
    %222 = vmatprep.subr.mxu0 0.0
    %223 = vmatpush1.xpose.msra.mxu0 0.0
    %224 = vmatprep.subr.mxu0 0.0
    %225 = vmatpush1.xpose.msra.mxu0 0.0
    %226 = vmatprep.subr.mxu0 0.0
    %227 = vmatpush1.xpose.msra.mxu0 0.0
    %228 = vmatprep.subr.mxu0 0.0
    %229 = vmatpush1.xpose.msra.mxu0 0.0
    %230 = vmatprep.subr.mxu0 0.0
    %231 = vmatpush1.xpose.msra.mxu0 0.0
    %232 = vmatprep.subr.mxu0 0.0
    %233 = vmatpush1.xpose.msra.mxu0 0.0
    %234 = vmatprep.subr.mxu0 0.0
    %235 = vmatpush1.xpose.msra.mxu0 0.0
    %236 = vmatprep.subr.mxu0 0.0
    %237 = vmatpush1.xpose.msra.mxu0 0.0
    %238 = vmatprep.mubr.f32.mxu0 0.0
    %239 = vmatmul.mubr.f32.gmra.mrb[0].mxu0 %v170
    %v240 = vpop.f32.mrb[0].mxu0
    %v241 = vadd.f32 0.0, %v240
    %v242 = vpop.f32.mrb[0].mxu0
    %243 = vdwg.mxu0
    %245 = vrot.lane.b32.xlu0 %v163, 96
    %v246 = vpop.permute.xlu0 %245
    %v247 = vsel %vm169, %v163, 0
    %v249 = vsel %vm169, %v246, 0
    %251 = vmatprep.subr.mxu0 0.0
    %252 = vmatpush1.xpose.msra.mxu0 %v249
    %253 = vmatprep.subr.mxu0 0.0
    %254 = vmatpush1.xpose.msra.mxu0 0.0
    %255 = vmatprep.subr.mxu0 0.0
    %256 = vmatpush1.xpose.msra.mxu0 0.0
    %257 = vmatprep.subr.mxu0 0.0
    %258 = vmatpush1.xpose.msra.mxu0 0.0
    %259 = vmatprep.subr.mxu0 0.0
    %260 = vmatpush1.xpose.msra.mxu0 0.0
    %261 = vmatprep.subr.mxu0 0.0
    %262 = vmatpush1.xpose.msra.mxu0 0.0
    %263 = vmatprep.subr.mxu0 0.0
    %264 = vmatpush1.xpose.msra.mxu0 0.0
    %265 = vmatprep.subr.mxu0 0.0
    %266 = vmatpush1.xpose.msra.mxu0 0.0
    %267 = vmatprep.subr.mxu0 0.0
    %268 = vmatpush1.xpose.msra.mxu0 0.0
    %269 = vmatprep.subr.mxu0 0.0
    %270 = vmatpush1.xpose.msra.mxu0 0.0
    %271 = vmatprep.subr.mxu0 0.0
    %272 = vmatpush1.xpose.msra.mxu0 0.0
    %273 = vmatprep.subr.mxu0 0.0
    %274 = vmatpush1.xpose.msra.mxu0 0.0
    %275 = vmatprep.subr.mxu0 0.0
    %276 = vmatpush1.xpose.msra.mxu0 0.0
    %277 = vmatprep.subr.mxu0 0.0
    %278 = vmatpush1.xpose.msra.mxu0 0.0
    %279 = vmatprep.subr.mxu0 0.0
    %280 = vmatpush1.xpose.msra.mxu0 0.0
    %281 = vmatprep.subr.mxu0 0.0
    %282 = vmatpush1.xpose.msra.mxu0 0.0
    %283 = vmatprep.subr.mxu0 0.0
    %284 = vmatpush1.xpose.msra.mxu0 0.0
    %285 = vmatprep.subr.mxu0 0.0
    %286 = vmatpush1.xpose.msra.mxu0 0.0
    %287 = vmatprep.subr.mxu0 0.0
    %288 = vmatpush1.xpose.msra.mxu0 0.0
    %289 = vmatprep.subr.mxu0 0.0
    %290 = vmatpush1.xpose.msra.mxu0 0.0
    %291 = vmatprep.subr.mxu0 0.0
    %292 = vmatpush1.xpose.msra.mxu0 0.0
    %293 = vmatprep.subr.mxu0 0.0
    %294 = vmatpush1.xpose.msra.mxu0 0.0
    %295 = vmatprep.subr.mxu0 0.0
    %296 = vmatpush1.xpose.msra.mxu0 0.0
    %297 = vmatprep.subr.mxu0 0.0
    %298 = vmatpush1.xpose.msra.mxu0 0.0
    %299 = vmatprep.subr.mxu0 0.0
    %300 = vmatpush1.xpose.msra.mxu0 0.0
    %301 = vmatprep.subr.mxu0 0.0
    %302 = vmatpush1.xpose.msra.mxu0 0.0
    %303 = vmatprep.subr.mxu0 0.0
    %304 = vmatpush1.xpose.msra.mxu0 0.0
    %305 = vmatprep.subr.mxu0 0.0
    %306 = vmatpush1.xpose.msra.mxu0 0.0
    %307 = vmatprep.subr.mxu0 0.0
    %308 = vmatpush1.xpose.msra.mxu0 0.0
    %309 = vmatprep.subr.mxu0 0.0
    %310 = vmatpush1.xpose.msra.mxu0 0.0
    %311 = vmatprep.subr.mxu0 0.0
    %312 = vmatpush1.xpose.msra.mxu0 0.0
    %313 = vmatprep.subr.mxu0 0.0
    %314 = vmatpush1.xpose.msra.mxu0 0.0
    %315 = vmatprep.mubr.f32.mxu0 0.0
    %316 = vmatmul.mubr.f32.gmra.mrb[0].mxu0 %v247
    %v317 = vpop.f32.mrb[0].mxu0
    %v318 = vadd.f32 0.0, %v317
    %v319 = vpop.f32.mrb[0].mxu0
    %320 = vdwg.mxu0
    %v321 = vsel %vm169, %v241, -inf
    %322 = vmax.xlane.f32.xlu0 %v321
    %v323 = vpop.xlane.xlu0 %322
    %v324 = vsel %vm169, %v318, -inf
    %325 = vmax.xlane.f32.xlu0 %v324
    %v326 = vpop.xlane.xlu0 %325
    %v327 = vsub.f32 %v241, %v323
    %v328 = vsub.f32 %v318, %v326
    %v329 = vmul.f32 %v327, 1.442695
    %v330 = vpow.pop %v329
    %v331 = vmul.f32 %v328, 1.442695
    %v332 = vpow.pop %v331
    %v333 = vsel %vm169, %v330, 0.0
    %334 = vadd.xlane.f32.xlu0 %v333
    %v335 = vpop.xlane.xlu0 %334
    %v336 = vsel %vm169, %v332, 0.0
    %337 = vadd.xlane.f32.xlu0 %v336
    %v338 = vpop.xlane.xlu0 %337
    %v339 = vrcp.pop %v335
    %v340 = vrcp.pop %v338
    %v341 = vmul.f32 %v330, %v339
    %v342 = vmul.f32 %v332, %v340
    %343 = vrot.lane.b32.xlu0 %v158, 64
    %v344 = vpop.permute.xlu0 %343
    %v347 = vsel %vm169, %v341, 0
    %349 = vmatprep.subr.mxu0 0.0
    %350 = vmatpush1.msra.mxu0 %v344
    %351 = vmatprep.subr.mxu0 0.0
    %352 = vmatpush1.msra.mxu0 0.0
    %353 = vmatprep.subr.mxu0 0.0
    %354 = vmatpush1.msra.mxu0 0.0
    %355 = vmatprep.subr.mxu0 0.0
    %356 = vmatpush1.msra.mxu0 0.0
    %357 = vmatprep.subr.mxu0 0.0
    %358 = vmatpush1.msra.mxu0 0.0
    %359 = vmatprep.subr.mxu0 0.0
    %360 = vmatpush1.msra.mxu0 0.0
    %361 = vmatprep.subr.mxu0 0.0
    %362 = vmatpush1.msra.mxu0 0.0
    %363 = vmatprep.subr.mxu0 0.0
    %364 = vmatpush1.msra.mxu0 0.0
    %365 = vmatprep.subr.mxu0 0.0
    %366 = vmatpush1.msra.mxu0 0.0
    %367 = vmatprep.subr.mxu0 0.0
    %368 = vmatpush1.msra.mxu0 0.0
    %369 = vmatprep.subr.mxu0 0.0
    %370 = vmatpush1.msra.mxu0 0.0
    %371 = vmatprep.subr.mxu0 0.0
    %372 = vmatpush1.msra.mxu0 0.0
    %373 = vmatprep.subr.mxu0 0.0
    %374 = vmatpush1.msra.mxu0 0.0
    %375 = vmatprep.subr.mxu0 0.0
    %376 = vmatpush1.msra.mxu0 0.0
    %377 = vmatprep.subr.mxu0 0.0
    %378 = vmatpush1.msra.mxu0 0.0
    %379 = vmatprep.subr.mxu0 0.0
    %380 = vmatpush1.msra.mxu0 0.0
    %381 = vmatprep.subr.mxu0 0.0
    %382 = vmatpush1.msra.mxu0 0.0
    %383 = vmatprep.subr.mxu0 0.0
    %384 = vmatpush1.msra.mxu0 0.0
    %385 = vmatprep.subr.mxu0 0.0
    %386 = vmatpush1.msra.mxu0 0.0
    %387 = vmatprep.subr.mxu0 0.0
    %388 = vmatpush1.msra.mxu0 0.0
    %389 = vmatprep.subr.mxu0 0.0
    %390 = vmatpush1.msra.mxu0 0.0
    %391 = vmatprep.subr.mxu0 0.0
    %392 = vmatpush1.msra.mxu0 0.0
    %393 = vmatprep.subr.mxu0 0.0
    %394 = vmatpush1.msra.mxu0 0.0
    %395 = vmatprep.subr.mxu0 0.0
    %396 = vmatpush1.msra.mxu0 0.0
    %397 = vmatprep.subr.mxu0 0.0
    %398 = vmatpush1.msra.mxu0 0.0
    %399 = vmatprep.subr.mxu0 0.0
    %400 = vmatpush1.msra.mxu0 0.0
    %401 = vmatprep.subr.mxu0 0.0
    %402 = vmatpush1.msra.mxu0 0.0
    %403 = vmatprep.subr.mxu0 0.0
    %404 = vmatpush1.msra.mxu0 0.0
    %405 = vmatprep.subr.mxu0 0.0
    %406 = vmatpush1.msra.mxu0 0.0
    %407 = vmatprep.subr.mxu0 0.0
    %408 = vmatpush1.msra.mxu0 0.0
    %409 = vmatprep.subr.mxu0 0.0
    %410 = vmatpush1.msra.mxu0 0.0
    %411 = vmatprep.subr.mxu0 0.0
    %412 = vmatpush1.msra.mxu0 0.0
    %413 = vmatprep.mubr.f32.mxu0 0.0
    %414 = vmatmul.mubr.f32.gmra.mrb[0].mxu0 %v347
    %v415 = vpop.f32.mrb[0].mxu0
    %v416 = vadd.f32 0.0, %v415
    %v417 = vpop.f32.mrb[0].mxu0
    %418 = vdwg.mxu0
    %419 = vrot.lane.b32.xlu0 %v163, 64
    %v420 = vpop.permute.xlu0 %419
    %v423 = vsel %vm169, %v342, 0
    %425 = vmatprep.subr.mxu0 0.0
    %426 = vmatpush1.msra.mxu0 %v420
    %427 = vmatprep.subr.mxu0 0.0
    %428 = vmatpush1.msra.mxu0 0.0
    %429 = vmatprep.subr.mxu0 0.0
    %430 = vmatpush1.msra.mxu0 0.0
    %431 = vmatprep.subr.mxu0 0.0
    %432 = vmatpush1.msra.mxu0 0.0
    %433 = vmatprep.subr.mxu0 0.0
    %434 = vmatpush1.msra.mxu0 0.0
    %435 = vmatprep.subr.mxu0 0.0
    %436 = vmatpush1.msra.mxu0 0.0
    %437 = vmatprep.subr.mxu0 0.0
    %438 = vmatpush1.msra.mxu0 0.0
    %439 = vmatprep.subr.mxu0 0.0
    %440 = vmatpush1.msra.mxu0 0.0
    %441 = vmatprep.subr.mxu0 0.0
    %442 = vmatpush1.msra.mxu0 0.0
    %443 = vmatprep.subr.mxu0 0.0
    %444 = vmatpush1.msra.mxu0 0.0
    %445 = vmatprep.subr.mxu0 0.0
    %446 = vmatpush1.msra.mxu0 0.0
    %447 = vmatprep.subr.mxu0 0.0
    %448 = vmatpush1.msra.mxu0 0.0
    %449 = vmatprep.subr.mxu0 0.0
    %450 = vmatpush1.msra.mxu0 0.0
    %451 = vmatprep.subr.mxu0 0.0
    %452 = vmatpush1.msra.mxu0 0.0
    %453 = vmatprep.subr.mxu0 0.0
    %454 = vmatpush1.msra.mxu0 0.0
    %455 = vmatprep.subr.mxu0 0.0
    %456 = vmatpush1.msra.mxu0 0.0
    %457 = vmatprep.subr.mxu0 0.0
    %458 = vmatpush1.msra.mxu0 0.0
    %459 = vmatprep.subr.mxu0 0.0
    %460 = vmatpush1.msra.mxu0 0.0
    %461 = vmatprep.subr.mxu0 0.0
    %462 = vmatpush1.msra.mxu0 0.0
    %463 = vmatprep.subr.mxu0 0.0
    %464 = vmatpush1.msra.mxu0 0.0
    %465 = vmatprep.subr.mxu0 0.0
    %466 = vmatpush1.msra.mxu0 0.0
    %467 = vmatprep.subr.mxu0 0.0
    %468 = vmatpush1.msra.mxu0 0.0
    %469 = vmatprep.subr.mxu0 0.0
    %470 = vmatpush1.msra.mxu0 0.0
    %471 = vmatprep.subr.mxu0 0.0
    %472 = vmatpush1.msra.mxu0 0.0
    %473 = vmatprep.subr.mxu0 0.0
    %474 = vmatpush1.msra.mxu0 0.0
    %475 = vmatprep.subr.mxu0 0.0
    %476 = vmatpush1.msra.mxu0 0.0
    %477 = vmatprep.subr.mxu0 0.0
    %478 = vmatpush1.msra.mxu0 0.0
    %479 = vmatprep.subr.mxu0 0.0
    %480 = vmatpush1.msra.mxu0 0.0
    %481 = vmatprep.subr.mxu0 0.0
    %482 = vmatpush1.msra.mxu0 0.0
    %483 = vmatprep.subr.mxu0 0.0
    %484 = vmatpush1.msra.mxu0 0.0
    %485 = vmatprep.subr.mxu0 0.0
    %486 = vmatpush1.msra.mxu0 0.0
    %487 = vmatprep.subr.mxu0 0.0
    %488 = vmatpush1.msra.mxu0 0.0
    %489 = vmatprep.mubr.f32.mxu0 0.0
    %490 = vmatmul.mubr.f32.gmra.mrb[0].mxu0 %v423
    %v491 = vpop.f32.mrb[0].mxu0
    %v492 = vadd.f32 0.0, %v491
    %v493 = vpop.f32.mrb[0].mxu0
    %494 = vdwg.mxu0
    %v495 = vld [vmem:[%s4] sm:$0xff]
    %496 = vrot.lane.b32.xlu0 %v158, 120
    %v497 = vpop.permute.xlu0 %496
    %498 = vrot.lane.b32.xlu0 %v158, 88
    %v499 = vpop.permute.xlu0 %498
    %v500 = vsel %vm169, %v497, 0
    %v502 = vsel %vm169, %v499, 0
    %504 = vmatprep.subr.mxu0 0.0
    %505 = vmatpush1.xpose.msra.mxu0 %v502
    %506 = vmatprep.subr.mxu0 0.0
    %507 = vmatpush1.xpose.msra.mxu0 0.0
    %508 = vmatprep.subr.mxu0 0.0
    %509 = vmatpush1.xpose.msra.mxu0 0.0
    %510 = vmatprep.subr.mxu0 0.0
    %511 = vmatpush1.xpose.msra.mxu0 0.0
    %512 = vmatprep.subr.mxu0 0.0
    %513 = vmatpush1.xpose.msra.mxu0 0.0
    %514 = vmatprep.subr.mxu0 0.0
    %515 = vmatpush1.xpose.msra.mxu0 0.0
    %516 = vmatprep.subr.mxu0 0.0
    %517 = vmatpush1.xpose.msra.mxu0 0.0
    %518 = vmatprep.subr.mxu0 0.0
    %519 = vmatpush1.xpose.msra.mxu0 0.0
    %520 = vmatprep.subr.mxu0 0.0
    %521 = vmatpush1.xpose.msra.mxu0 0.0
    %522 = vmatprep.subr.mxu0 0.0
    %523 = vmatpush1.xpose.msra.mxu0 0.0
    %524 = vmatprep.subr.mxu0 0.0
    %525 = vmatpush1.xpose.msra.mxu0 0.0
    %526 = vmatprep.subr.mxu0 0.0
    %527 = vmatpush1.xpose.msra.mxu0 0.0
    %528 = vmatprep.subr.mxu0 0.0
    %529 = vmatpush1.xpose.msra.mxu0 0.0
    %530 = vmatprep.subr.mxu0 0.0
    %531 = vmatpush1.xpose.msra.mxu0 0.0
    %532 = vmatprep.subr.mxu0 0.0
    %533 = vmatpush1.xpose.msra.mxu0 0.0
    %534 = vmatprep.subr.mxu0 0.0
    %535 = vmatpush1.xpose.msra.mxu0 0.0
    %536 = vmatprep.subr.mxu0 0.0
    %537 = vmatpush1.xpose.msra.mxu0 0.0
    %538 = vmatprep.subr.mxu0 0.0
    %539 = vmatpush1.xpose.msra.mxu0 0.0
    %540 = vmatprep.subr.mxu0 0.0
    %541 = vmatpush1.xpose.msra.mxu0 0.0
    %542 = vmatprep.subr.mxu0 0.0
    %543 = vmatpush1.xpose.msra.mxu0 0.0
    %544 = vmatprep.subr.mxu0 0.0
    %545 = vmatpush1.xpose.msra.mxu0 0.0
    %546 = vmatprep.subr.mxu0 0.0
    %547 = vmatpush1.xpose.msra.mxu0 0.0
    %548 = vmatprep.subr.mxu0 0.0
    %549 = vmatpush1.xpose.msra.mxu0 0.0
    %550 = vmatprep.subr.mxu0 0.0
    %551 = vmatpush1.xpose.msra.mxu0 0.0
    %552 = vmatprep.subr.mxu0 0.0
    %553 = vmatpush1.xpose.msra.mxu0 0.0
    %554 = vmatprep.subr.mxu0 0.0
    %555 = vmatpush1.xpose.msra.mxu0 0.0
    %556 = vmatprep.subr.mxu0 0.0
    %557 = vmatpush1.xpose.msra.mxu0 0.0
    %558 = vmatprep.subr.mxu0 0.0
    %559 = vmatpush1.xpose.msra.mxu0 0.0
    %560 = vmatprep.subr.mxu0 0.0
    %561 = vmatpush1.xpose.msra.mxu0 0.0
    %562 = vmatprep.subr.mxu0 0.0
    %563 = vmatpush1.xpose.msra.mxu0 0.0
    %564 = vmatprep.subr.mxu0 0.0
    %565 = vmatpush1.xpose.msra.mxu0 0.0
    %566 = vmatprep.subr.mxu0 0.0
    %567 = vmatpush1.xpose.msra.mxu0 0.0
    %568 = vmatprep.mubr.f32.mxu0 0.0
    %569 = vmatmul.mubr.f32.gmra.mrb[0].mxu0 %v500
    %v570 = vpop.f32.mrb[0].mxu0
    %v571 = vadd.f32 0.0, %v570
    %v572 = vpop.f32.mrb[0].mxu0
    %573 = vdwg.mxu0
    %574 = vrot.lane.b32.xlu0 %v163, 120
    %v575 = vpop.permute.xlu0 %574
    %576 = vrot.lane.b32.xlu0 %v163, 88
    %v577 = vpop.permute.xlu0 %576
    %v578 = vsel %vm169, %v575, 0
    %v580 = vsel %vm169, %v577, 0
    %582 = vmatprep.subr.mxu0 0.0
    %583 = vmatpush1.xpose.msra.mxu0 %v580
    %584 = vmatprep.subr.mxu0 0.0
    %585 = vmatpush1.xpose.msra.mxu0 0.0
    %586 = vmatprep.subr.mxu0 0.0
    %587 = vmatpush1.xpose.msra.mxu0 0.0
    %588 = vmatprep.subr.mxu0 0.0
    %589 = vmatpush1.xpose.msra.mxu0 0.0
    %590 = vmatprep.subr.mxu0 0.0
    %591 = vmatpush1.xpose.msra.mxu0 0.0
    %592 = vmatprep.subr.mxu0 0.0
    %593 = vmatpush1.xpose.msra.mxu0 0.0
    %594 = vmatprep.subr.mxu0 0.0
    %595 = vmatpush1.xpose.msra.mxu0 0.0
    %596 = vmatprep.subr.mxu0 0.0
    %597 = vmatpush1.xpose.msra.mxu0 0.0
    %598 = vmatprep.subr.mxu0 0.0
    %599 = vmatpush1.xpose.msra.mxu0 0.0
    %600 = vmatprep.subr.mxu0 0.0
    %601 = vmatpush1.xpose.msra.mxu0 0.0
    %602 = vmatprep.subr.mxu0 0.0
    %603 = vmatpush1.xpose.msra.mxu0 0.0
    %604 = vmatprep.subr.mxu0 0.0
    %605 = vmatpush1.xpose.msra.mxu0 0.0
    %606 = vmatprep.subr.mxu0 0.0
    %607 = vmatpush1.xpose.msra.mxu0 0.0
    %608 = vmatprep.subr.mxu0 0.0
    %609 = vmatpush1.xpose.msra.mxu0 0.0
    %610 = vmatprep.subr.mxu0 0.0
    %611 = vmatpush1.xpose.msra.mxu0 0.0
    %612 = vmatprep.subr.mxu0 0.0
    %613 = vmatpush1.xpose.msra.mxu0 0.0
    %614 = vmatprep.subr.mxu0 0.0
    %615 = vmatpush1.xpose.msra.mxu0 0.0
    %616 = vmatprep.subr.mxu0 0.0
    %617 = vmatpush1.xpose.msra.mxu0 0.0
    %618 = vmatprep.subr.mxu0 0.0
    %619 = vmatpush1.xpose.msra.mxu0 0.0
    %620 = vmatprep.subr.mxu0 0.0
    %621 = vmatpush1.xpose.msra.mxu0 0.0
    %622 = vmatprep.subr.mxu0 0.0
    %623 = vmatpush1.xpose.msra.mxu0 0.0
    %624 = vmatprep.subr.mxu0 0.0
    %625 = vmatpush1.xpose.msra.mxu0 0.0
    %626 = vmatprep.subr.mxu0 0.0
    %627 = vmatpush1.xpose.msra.mxu0 0.0
    %628 = vmatprep.subr.mxu0 0.0
    %629 = vmatpush1.xpose.msra.mxu0 0.0
    %630 = vmatprep.subr.mxu0 0.0
    %631 = vmatpush1.xpose.msra.mxu0 0.0
    %632 = vmatprep.subr.mxu0 0.0
    %633 = vmatpush1.xpose.msra.mxu0 0.0
    %634 = vmatprep.subr.mxu0 0.0
    %635 = vmatpush1.xpose.msra.mxu0 0.0
    %636 = vmatprep.subr.mxu0 0.0
    %637 = vmatpush1.xpose.msra.mxu0 0.0
    %638 = vmatprep.subr.mxu0 0.0
    %639 = vmatpush1.xpose.msra.mxu0 0.0
    %640 = vmatprep.subr.mxu0 0.0
    %641 = vmatpush1.xpose.msra.mxu0 0.0
    %642 = vmatprep.subr.mxu0 0.0
    %643 = vmatpush1.xpose.msra.mxu0 0.0
    %644 = vmatprep.subr.mxu0 0.0
    %645 = vmatpush1.xpose.msra.mxu0 0.0
    %646 = vmatprep.mubr.f32.mxu0 0.0
    %647 = vmatmul.mubr.f32.gmra.mrb[0].mxu0 %v578
    %v648 = vpop.f32.mrb[0].mxu0
    %v649 = vadd.f32 0.0, %v648
    %v650 = vpop.f32.mrb[0].mxu0
    %651 = vdwg.mxu0
    %v652 = vsel %vm169, %v571, -inf
    %653 = vmax.xlane.f32.xlu0 %v652
    %v654 = vpop.xlane.xlu0 %653
    %v655 = vsel %vm169, %v649, -inf
    %656 = vmax.xlane.f32.xlu0 %v655
    %v657 = vpop.xlane.xlu0 %656
    %v658 = vsub.f32 %v571, %v654
    %v659 = vsub.f32 %v649, %v657
    %v660 = vmul.f32 %v658, 1.442695
    %v661 = vpow.pop %v660
    %v662 = vmul.f32 %v659, 1.442695
    %v663 = vpow.pop %v662
    %v664 = vsel %vm169, %v661, 0.0
    %665 = vadd.xlane.f32.xlu0 %v664
    %v666 = vpop.xlane.xlu0 %665
    %v667 = vsel %vm169, %v663, 0.0
    %668 = vadd.xlane.f32.xlu0 %v667
    %v669 = vpop.xlane.xlu0 %668
    %v670 = vrcp.pop %v666
    %v671 = vrcp.pop %v669
    %v672 = vmul.f32 %v661, %v670
    %v673 = vmul.f32 %v663, %v671
    %674 = vrot.lane.b32.xlu0 %v158, 56
    %v675 = vpop.permute.xlu0 %674
    %v678 = vsel %vm169, %v672, 0
    %680 = vmatprep.subr.mxu0 0.0
    %681 = vmatpush1.msra.mxu0 %v675
    %682 = vmatprep.subr.mxu0 0.0
    %683 = vmatpush1.msra.mxu0 0.0
    %684 = vmatprep.subr.mxu0 0.0
    %685 = vmatpush1.msra.mxu0 0.0
    %686 = vmatprep.subr.mxu0 0.0
    %687 = vmatpush1.msra.mxu0 0.0
    %688 = vmatprep.subr.mxu0 0.0
    %689 = vmatpush1.msra.mxu0 0.0
    %690 = vmatprep.subr.mxu0 0.0
    %691 = vmatpush1.msra.mxu0 0.0
    %692 = vmatprep.subr.mxu0 0.0
    %693 = vmatpush1.msra.mxu0 0.0
    %694 = vmatprep.subr.mxu0 0.0
    %695 = vmatpush1.msra.mxu0 0.0
    %696 = vmatprep.subr.mxu0 0.0
    %697 = vmatpush1.msra.mxu0 0.0
    %698 = vmatprep.subr.mxu0 0.0
    %699 = vmatpush1.msra.mxu0 0.0
    %700 = vmatprep.subr.mxu0 0.0
    %701 = vmatpush1.msra.mxu0 0.0
    %702 = vmatprep.subr.mxu0 0.0
    %703 = vmatpush1.msra.mxu0 0.0
    %704 = vmatprep.subr.mxu0 0.0
    %705 = vmatpush1.msra.mxu0 0.0
    %706 = vmatprep.subr.mxu0 0.0
    %707 = vmatpush1.msra.mxu0 0.0
    %708 = vmatprep.subr.mxu0 0.0
    %709 = vmatpush1.msra.mxu0 0.0
    %710 = vmatprep.subr.mxu0 0.0
    %711 = vmatpush1.msra.mxu0 0.0
    %712 = vmatprep.subr.mxu0 0.0
    %713 = vmatpush1.msra.mxu0 0.0
    %714 = vmatprep.subr.mxu0 0.0
    %715 = vmatpush1.msra.mxu0 0.0
    %716 = vmatprep.subr.mxu0 0.0
    %717 = vmatpush1.msra.mxu0 0.0
    %718 = vmatprep.subr.mxu0 0.0
    %719 = vmatpush1.msra.mxu0 0.0
    %720 = vmatprep.subr.mxu0 0.0
    %721 = vmatpush1.msra.mxu0 0.0
    %722 = vmatprep.subr.mxu0 0.0
    %723 = vmatpush1.msra.mxu0 0.0
    %724 = vmatprep.subr.mxu0 0.0
    %725 = vmatpush1.msra.mxu0 0.0
    %726 = vmatprep.subr.mxu0 0.0
    %727 = vmatpush1.msra.mxu0 0.0
    %728 = vmatprep.subr.mxu0 0.0
    %729 = vmatpush1.msra.mxu0 0.0
    %730 = vmatprep.subr.mxu0 0.0
    %731 = vmatpush1.msra.mxu0 0.0
    %732 = vmatprep.subr.mxu0 0.0
    %733 = vmatpush1.msra.mxu0 0.0
    %734 = vmatprep.subr.mxu0 0.0
    %735 = vmatpush1.msra.mxu0 0.0
    %736 = vmatprep.subr.mxu0 0.0
    %737 = vmatpush1.msra.mxu0 0.0
    %738 = vmatprep.subr.mxu0 0.0
    %739 = vmatpush1.msra.mxu0 0.0
    %740 = vmatprep.subr.mxu0 0.0
    %741 = vmatpush1.msra.mxu0 0.0
    %742 = vmatprep.subr.mxu0 0.0
    %743 = vmatpush1.msra.mxu0 0.0
    %744 = vmatprep.mubr.f32.mxu0 0.0
    %745 = vmatmul.mubr.f32.gmra.mrb[0].mxu0 %v678
    %v746 = vpop.f32.mrb[0].mxu0
    %v747 = vadd.f32 0.0, %v746
    %v748 = vpop.f32.mrb[0].mxu0
    %749 = vdwg.mxu0
    %750 = vrot.lane.b32.xlu0 %v163, 56
    %v751 = vpop.permute.xlu0 %750
    %v754 = vsel %vm169, %v673, 0
    %756 = vmatprep.subr.mxu0 0.0
    %757 = vmatpush1.msra.mxu0 %v751
    %758 = vmatprep.subr.mxu0 0.0
    %759 = vmatpush1.msra.mxu0 0.0
    %760 = vmatprep.subr.mxu0 0.0
    %761 = vmatpush1.msra.mxu0 0.0
    %762 = vmatprep.subr.mxu0 0.0
    %763 = vmatpush1.msra.mxu0 0.0
    %764 = vmatprep.subr.mxu0 0.0
    %765 = vmatpush1.msra.mxu0 0.0
    %766 = vmatprep.subr.mxu0 0.0
    %767 = vmatpush1.msra.mxu0 0.0
    %768 = vmatprep.subr.mxu0 0.0
    %769 = vmatpush1.msra.mxu0 0.0
    %770 = vmatprep.subr.mxu0 0.0
    %771 = vmatpush1.msra.mxu0 0.0
    %772 = vmatprep.subr.mxu0 0.0
    %773 = vmatpush1.msra.mxu0 0.0
    %774 = vmatprep.subr.mxu0 0.0
    %775 = vmatpush1.msra.mxu0 0.0
    %776 = vmatprep.subr.mxu0 0.0
    %777 = vmatpush1.msra.mxu0 0.0
    %778 = vmatprep.subr.mxu0 0.0
    %779 = vmatpush1.msra.mxu0 0.0
    %780 = vmatprep.subr.mxu0 0.0
    %781 = vmatpush1.msra.mxu0 0.0
    %782 = vmatprep.subr.mxu0 0.0
    %783 = vmatpush1.msra.mxu0 0.0
    %784 = vmatprep.subr.mxu0 0.0
    %785 = vmatpush1.msra.mxu0 0.0
    %786 = vmatprep.subr.mxu0 0.0
    %787 = vmatpush1.msra.mxu0 0.0
    %788 = vmatprep.subr.mxu0 0.0
    %789 = vmatpush1.msra.mxu0 0.0
    %790 = vmatprep.subr.mxu0 0.0
    %791 = vmatpush1.msra.mxu0 0.0
    %792 = vmatprep.subr.mxu0 0.0
    %793 = vmatpush1.msra.mxu0 0.0
    %794 = vmatprep.subr.mxu0 0.0
    %795 = vmatpush1.msra.mxu0 0.0
    %796 = vmatprep.subr.mxu0 0.0
    %797 = vmatpush1.msra.mxu0 0.0
    %798 = vmatprep.subr.mxu0 0.0
    %799 = vmatpush1.msra.mxu0 0.0
    %800 = vmatprep.subr.mxu0 0.0
    %801 = vmatpush1.msra.mxu0 0.0
    %802 = vmatprep.subr.mxu0 0.0
    %803 = vmatpush1.msra.mxu0 0.0
    %804 = vmatprep.subr.mxu0 0.0
    %805 = vmatpush1.msra.mxu0 0.0
    %806 = vmatprep.subr.mxu0 0.0
    %807 = vmatpush1.msra.mxu0 0.0
    %808 = vmatprep.subr.mxu0 0.0
    %809 = vmatpush1.msra.mxu0 0.0
    %810 = vmatprep.subr.mxu0 0.0
    %811 = vmatpush1.msra.mxu0 0.0
    %812 = vmatprep.subr.mxu0 0.0
    %813 = vmatpush1.msra.mxu0 0.0
    %814 = vmatprep.subr.mxu0 0.0
    %815 = vmatpush1.msra.mxu0 0.0
    %816 = vmatprep.subr.mxu0 0.0
    %817 = vmatpush1.msra.mxu0 0.0
    %818 = vmatprep.subr.mxu0 0.0
    %819 = vmatpush1.msra.mxu0 0.0
    %820 = vmatprep.mubr.f32.mxu0 0.0
    %821 = vmatmul.mubr.f32.gmra.mrb[0].mxu0 %v754
    %v822 = vpop.f32.mrb[0].mxu0
    %v823 = vadd.f32 0.0, %v822
    %v824 = vpop.f32.mrb[0].mxu0
    %825 = vdwg.mxu0
    %s826 = scalar_lea.vmem %s4, 8
    %v827 = vld [vmem:[%s826] sm:$0xff]
    %v829 = vsel %vm169, %v747, 0
    %v832 = vsel %vm169, %v823, 0
    %834 = vmatprep.subr.mxu0 0.0
    %835 = vmatpush1.msra.mxu0 %v827
    %836 = vmatprep.subr.mxu0 0.0
    %837 = vmatpush1.msra.mxu0 0.0
    %838 = vmatprep.subr.mxu0 0.0
    %839 = vmatpush1.msra.mxu0 0.0
    %840 = vmatprep.subr.mxu0 0.0
    %841 = vmatpush1.msra.mxu0 0.0
    %842 = vmatprep.subr.mxu0 0.0
    %843 = vmatpush1.msra.mxu0 0.0
    %844 = vmatprep.subr.mxu0 0.0
    %845 = vmatpush1.msra.mxu0 0.0
    %846 = vmatprep.subr.mxu0 0.0
    %847 = vmatpush1.msra.mxu0 0.0
    %848 = vmatprep.subr.mxu0 0.0
    %849 = vmatpush1.msra.mxu0 0.0
    %850 = vmatprep.subr.mxu0 0.0
    %851 = vmatpush1.msra.mxu0 0.0
    %852 = vmatprep.subr.mxu0 0.0
    %853 = vmatpush1.msra.mxu0 0.0
    %854 = vmatprep.subr.mxu0 0.0
    %855 = vmatpush1.msra.mxu0 0.0
    %856 = vmatprep.subr.mxu0 0.0
    %857 = vmatpush1.msra.mxu0 0.0
    %858 = vmatprep.subr.mxu0 0.0
    %859 = vmatpush1.msra.mxu0 0.0
    %860 = vmatprep.subr.mxu0 0.0
    %861 = vmatpush1.msra.mxu0 0.0
    %862 = vmatprep.subr.mxu0 0.0
    %863 = vmatpush1.msra.mxu0 0.0
    %864 = vmatprep.subr.mxu0 0.0
    %865 = vmatpush1.msra.mxu0 0.0
    %866 = vmatprep.subr.mxu0 0.0
    %867 = vmatpush1.msra.mxu0 0.0
    %868 = vmatprep.subr.mxu0 0.0
    %869 = vmatpush1.msra.mxu0 0.0
    %870 = vmatprep.subr.mxu0 0.0
    %871 = vmatpush1.msra.mxu0 0.0
    %872 = vmatprep.subr.mxu0 0.0
    %873 = vmatpush1.msra.mxu0 0.0
    %874 = vmatprep.subr.mxu0 0.0
    %875 = vmatpush1.msra.mxu0 0.0
    %876 = vmatprep.subr.mxu0 0.0
    %877 = vmatpush1.msra.mxu0 0.0
    %878 = vmatprep.subr.mxu0 0.0
    %879 = vmatpush1.msra.mxu0 0.0
    %880 = vmatprep.subr.mxu0 0.0
    %881 = vmatpush1.msra.mxu0 0.0
    %882 = vmatprep.subr.mxu0 0.0
    %883 = vmatpush1.msra.mxu0 0.0
    %884 = vmatprep.subr.mxu0 0.0
    %885 = vmatpush1.msra.mxu0 0.0
    %886 = vmatprep.subr.mxu0 0.0
    %887 = vmatpush1.msra.mxu0 0.0
    %888 = vmatprep.subr.mxu0 0.0
    %889 = vmatpush1.msra.mxu0 0.0
    %890 = vmatprep.subr.mxu0 0.0
    %891 = vmatpush1.msra.mxu0 0.0
    %892 = vmatprep.subr.mxu0 0.0
    %893 = vmatpush1.msra.mxu0 0.0
    %894 = vmatprep.subr.mxu0 0.0
    %895 = vmatpush1.msra.mxu0 0.0
    %896 = vmatprep.subr.mxu0 0.0
    %897 = vmatpush1.msra.mxu0 0.0
    %898 = vmatprep.mubr.f32.mxu0 0.0
    %899 = vmatmul.mubr.f32.gmra.mrb[0].mxu0 %v829
    %v900 = vpop.f32.mrb[0].mxu0
    %v901 = vadd.f32 0.0, %v900
    %v902 = vpop.f32.mrb[0].mxu0
    %903 = vmatprep.mubr.f32.mxu0 0.0
    %904 = vmatmul.mubr.f32.gmra.mrb[0].mxu0 %v832
    %v905 = vpop.f32.mrb[0].mxu0
    %v906 = vadd.f32 0.0, %v905
    %v907 = vpop.f32.mrb[0].mxu0
    %908 = vdwg.mxu0
    %v910 = vsel %vm169, %v416, 0
    %v913 = vsel %vm169, %v492, 0
    %915 = vmatprep.subr.mxu0 0.0
    %916 = vmatpush1.msra.mxu0 %v495
    %917 = vmatprep.subr.mxu0 0.0
    %918 = vmatpush1.msra.mxu0 0.0
    %919 = vmatprep.subr.mxu0 0.0
    %920 = vmatpush1.msra.mxu0 0.0
    %921 = vmatprep.subr.mxu0 0.0
    %922 = vmatpush1.msra.mxu0 0.0
    %923 = vmatprep.subr.mxu0 0.0
    %924 = vmatpush1.msra.mxu0 0.0
    %925 = vmatprep.subr.mxu0 0.0
    %926 = vmatpush1.msra.mxu0 0.0
    %927 = vmatprep.subr.mxu0 0.0
    %928 = vmatpush1.msra.mxu0 0.0
    %929 = vmatprep.subr.mxu0 0.0
    %930 = vmatpush1.msra.mxu0 0.0
    %931 = vmatprep.subr.mxu0 0.0
    %932 = vmatpush1.msra.mxu0 0.0
    %933 = vmatprep.subr.mxu0 0.0
    %934 = vmatpush1.msra.mxu0 0.0
    %935 = vmatprep.subr.mxu0 0.0
    %936 = vmatpush1.msra.mxu0 0.0
    %937 = vmatprep.subr.mxu0 0.0
    %938 = vmatpush1.msra.mxu0 0.0
    %939 = vmatprep.subr.mxu0 0.0
    %940 = vmatpush1.msra.mxu0 0.0
    %941 = vmatprep.subr.mxu0 0.0
    %942 = vmatpush1.msra.mxu0 0.0
    %943 = vmatprep.subr.mxu0 0.0
    %944 = vmatpush1.msra.mxu0 0.0
    %945 = vmatprep.subr.mxu0 0.0
    %946 = vmatpush1.msra.mxu0 0.0
    %947 = vmatprep.subr.mxu0 0.0
    %948 = vmatpush1.msra.mxu0 0.0
    %949 = vmatprep.subr.mxu0 0.0
    %950 = vmatpush1.msra.mxu0 0.0
    %951 = vmatprep.subr.mxu0 0.0
    %952 = vmatpush1.msra.mxu0 0.0
    %953 = vmatprep.subr.mxu0 0.0
    %954 = vmatpush1.msra.mxu0 0.0
    %955 = vmatprep.subr.mxu0 0.0
    %956 = vmatpush1.msra.mxu0 0.0
    %957 = vmatprep.subr.mxu0 0.0
    %958 = vmatpush1.msra.mxu0 0.0
    %959 = vmatprep.subr.mxu0 0.0
    %960 = vmatpush1.msra.mxu0 0.0
    %961 = vmatprep.subr.mxu0 0.0
    %962 = vmatpush1.msra.mxu0 0.0
    %963 = vmatprep.subr.mxu0 0.0
    %964 = vmatpush1.msra.mxu0 0.0
    %965 = vmatprep.subr.mxu0 0.0
    %966 = vmatpush1.msra.mxu0 0.0
    %967 = vmatprep.subr.mxu0 0.0
    %968 = vmatpush1.msra.mxu0 0.0
    %969 = vmatprep.subr.mxu0 0.0
    %970 = vmatpush1.msra.mxu0 0.0
    %971 = vmatprep.subr.mxu0 0.0
    %972 = vmatpush1.msra.mxu0 0.0
    %973 = vmatprep.subr.mxu0 0.0
    %974 = vmatpush1.msra.mxu0 0.0
    %975 = vmatprep.subr.mxu0 0.0
    %976 = vmatpush1.msra.mxu0 0.0
    %977 = vmatprep.subr.mxu0 0.0
    %978 = vmatpush1.msra.mxu0 0.0
    %979 = vmatprep.mubr.f32.mxu0 0.0
    %980 = vmatmul.mubr.f32.gmra.mrb[0].mxu0 %v910
    %v981 = vpop.f32.mrb[0].mxu0
    %v982 = vadd.f32 %v901, %v981
    %v983 = vpop.f32.mrb[0].mxu0
    %984 = vmatprep.mubr.f32.mxu0 0.0
    %985 = vmatmul.mubr.f32.gmra.mrb[0].mxu0 %v913
    %v986 = vpop.f32.mrb[0].mxu0
    %v987 = vadd.f32 %v906, %v986
    %v988 = vpop.f32.mrb[0].mxu0
    %989 = vdwg.mxu0
    %990 = vrot.lane.b32.xlu0 %v158, 112
    %v991 = vpop.permute.xlu0 %990
    %992 = vrot.lane.b32.xlu0 %v158, 80
    %v993 = vpop.permute.xlu0 %992
    %v994 = vsel %vm169, %v991, 0
    %v996 = vsel %vm169, %v993, 0
    %998 = vmatprep.subr.mxu0 0.0
    %999 = vmatpush1.xpose.msra.mxu0 %v996
    %1000 = vmatprep.subr.mxu0 0.0
    %1001 = vmatpush1.xpose.msra.mxu0 0.0
    %1002 = vmatprep.subr.mxu0 0.0
    %1003 = vmatpush1.xpose.msra.mxu0 0.0
    %1004 = vmatprep.subr.mxu0 0.0
    %1005 = vmatpush1.xpose.msra.mxu0 0.0
    %1006 = vmatprep.subr.mxu0 0.0
    %1007 = vmatpush1.xpose.msra.mxu0 0.0
    %1008 = vmatprep.subr.mxu0 0.0
    %1009 = vmatpush1.xpose.msra.mxu0 0.0
    %1010 = vmatprep.subr.mxu0 0.0
    %1011 = vmatpush1.xpose.msra.mxu0 0.0
    %1012 = vmatprep.subr.mxu0 0.0
    %1013 = vmatpush1.xpose.msra.mxu0 0.0
    %1014 = vmatprep.subr.mxu0 0.0
    %1015 = vmatpush1.xpose.msra.mxu0 0.0
    %1016 = vmatprep.subr.mxu0 0.0
    %1017 = vmatpush1.xpose.msra.mxu0 0.0
    %1018 = vmatprep.subr.mxu0 0.0
    %1019 = vmatpush1.xpose.msra.mxu0 0.0
    %1020 = vmatprep.subr.mxu0 0.0
    %1021 = vmatpush1.xpose.msra.mxu0 0.0
    %1022 = vmatprep.subr.mxu0 0.0
    %1023 = vmatpush1.xpose.msra.mxu0 0.0
    %1024 = vmatprep.subr.mxu0 0.0
    %1025 = vmatpush1.xpose.msra.mxu0 0.0
    %1026 = vmatprep.subr.mxu0 0.0
    %1027 = vmatpush1.xpose.msra.mxu0 0.0
    %1028 = vmatprep.subr.mxu0 0.0
    %1029 = vmatpush1.xpose.msra.mxu0 0.0
    %1030 = vmatprep.subr.mxu0 0.0
    %1031 = vmatpush1.xpose.msra.mxu0 0.0
    %1032 = vmatprep.subr.mxu0 0.0
    %1033 = vmatpush1.xpose.msra.mxu0 0.0
    %1034 = vmatprep.subr.mxu0 0.0
    %1035 = vmatpush1.xpose.msra.mxu0 0.0
    %1036 = vmatprep.subr.mxu0 0.0
    %1037 = vmatpush1.xpose.msra.mxu0 0.0
    %1038 = vmatprep.subr.mxu0 0.0
    %1039 = vmatpush1.xpose.msra.mxu0 0.0
    %1040 = vmatprep.subr.mxu0 0.0
    %1041 = vmatpush1.xpose.msra.mxu0 0.0
    %1042 = vmatprep.subr.mxu0 0.0
    %1043 = vmatpush1.xpose.msra.mxu0 0.0
    %1044 = vmatprep.subr.mxu0 0.0
    %1045 = vmatpush1.xpose.msra.mxu0 0.0
    %1046 = vmatprep.subr.mxu0 0.0
    %1047 = vmatpush1.xpose.msra.mxu0 0.0
    %1048 = vmatprep.subr.mxu0 0.0
    %1049 = vmatpush1.xpose.msra.mxu0 0.0
    %1050 = vmatprep.subr.mxu0 0.0
    %1051 = vmatpush1.xpose.msra.mxu0 0.0
    %1052 = vmatprep.subr.mxu0 0.0
    %1053 = vmatpush1.xpose.msra.mxu0 0.0
    %1054 = vmatprep.subr.mxu0 0.0
    %1055 = vmatpush1.xpose.msra.mxu0 0.0
    %1056 = vmatprep.subr.mxu0 0.0
    %1057 = vmatpush1.xpose.msra.mxu0 0.0
    %1058 = vmatprep.subr.mxu0 0.0
    %1059 = vmatpush1.xpose.msra.mxu0 0.0
    %1060 = vmatprep.subr.mxu0 0.0
    %1061 = vmatpush1.xpose.msra.mxu0 0.0
    %1062 = vmatprep.mubr.f32.mxu0 0.0
    %1063 = vmatmul.mubr.f32.gmra.mrb[0].mxu0 %v994
    %v1064 = vpop.f32.mrb[0].mxu0
    %v1065 = vadd.f32 0.0, %v1064
    %v1066 = vpop.f32.mrb[0].mxu0
    %1067 = vdwg.mxu0
    %1068 = vrot.lane.b32.xlu0 %v163, 112
    %v1069 = vpop.permute.xlu0 %1068
    %1070 = vrot.lane.b32.xlu0 %v163, 80
    %v1071 = vpop.permute.xlu0 %1070
    %v1072 = vsel %vm169, %v1069, 0
    %v1074 = vsel %vm169, %v1071, 0
    %1076 = vmatprep.subr.mxu0 0.0
    %1077 = vmatpush1.xpose.msra.mxu0 %v1074
    %1078 = vmatprep.subr.mxu0 0.0
    %1079 = vmatpush1.xpose.msra.mxu0 0.0
    %1080 = vmatprep.subr.mxu0 0.0
    %1081 = vmatpush1.xpose.msra.mxu0 0.0
    %1082 = vmatprep.subr.mxu0 0.0
    %1083 = vmatpush1.xpose.msra.mxu0 0.0
    %1084 = vmatprep.subr.mxu0 0.0
    %1085 = vmatpush1.xpose.msra.mxu0 0.0
    %1086 = vmatprep.subr.mxu0 0.0
    %1087 = vmatpush1.xpose.msra.mxu0 0.0
    %1088 = vmatprep.subr.mxu0 0.0
    %1089 = vmatpush1.xpose.msra.mxu0 0.0
    %1090 = vmatprep.subr.mxu0 0.0
    %1091 = vmatpush1.xpose.msra.mxu0 0.0
    %1092 = vmatprep.subr.mxu0 0.0
    %1093 = vmatpush1.xpose.msra.mxu0 0.0
    %1094 = vmatprep.subr.mxu0 0.0
    %1095 = vmatpush1.xpose.msra.mxu0 0.0
    %1096 = vmatprep.subr.mxu0 0.0
    %1097 = vmatpush1.xpose.msra.mxu0 0.0
    %1098 = vmatprep.subr.mxu0 0.0
    %1099 = vmatpush1.xpose.msra.mxu0 0.0
    %1100 = vmatprep.subr.mxu0 0.0
    %1101 = vmatpush1.xpose.msra.mxu0 0.0
    %1102 = vmatprep.subr.mxu0 0.0
    %1103 = vmatpush1.xpose.msra.mxu0 0.0
    %1104 = vmatprep.subr.mxu0 0.0
    %1105 = vmatpush1.xpose.msra.mxu0 0.0
    %1106 = vmatprep.subr.mxu0 0.0
    %1107 = vmatpush1.xpose.msra.mxu0 0.0
    %1108 = vmatprep.subr.mxu0 0.0
    %1109 = vmatpush1.xpose.msra.mxu0 0.0
    %1110 = vmatprep.subr.mxu0 0.0
    %1111 = vmatpush1.xpose.msra.mxu0 0.0
    %1112 = vmatprep.subr.mxu0 0.0
    %1113 = vmatpush1.xpose.msra.mxu0 0.0
    %1114 = vmatprep.subr.mxu0 0.0
    %1115 = vmatpush1.xpose.msra.mxu0 0.0
    %1116 = vmatprep.subr.mxu0 0.0
    %1117 = vmatpush1.xpose.msra.mxu0 0.0
    %1118 = vmatprep.subr.mxu0 0.0
    %1119 = vmatpush1.xpose.msra.mxu0 0.0
    %1120 = vmatprep.subr.mxu0 0.0
    %1121 = vmatpush1.xpose.msra.mxu0 0.0
    %1122 = vmatprep.subr.mxu0 0.0
    %1123 = vmatpush1.xpose.msra.mxu0 0.0
    %1124 = vmatprep.subr.mxu0 0.0
    %1125 = vmatpush1.xpose.msra.mxu0 0.0
    %1126 = vmatprep.subr.mxu0 0.0
    %1127 = vmatpush1.xpose.msra.mxu0 0.0
    %1128 = vmatprep.subr.mxu0 0.0
    %1129 = vmatpush1.xpose.msra.mxu0 0.0
    %1130 = vmatprep.subr.mxu0 0.0
    %1131 = vmatpush1.xpose.msra.mxu0 0.0
    %1132 = vmatprep.subr.mxu0 0.0
    %1133 = vmatpush1.xpose.msra.mxu0 0.0
    %1134 = vmatprep.subr.mxu0 0.0
    %1135 = vmatpush1.xpose.msra.mxu0 0.0
    %1136 = vmatprep.subr.mxu0 0.0
    %1137 = vmatpush1.xpose.msra.mxu0 0.0
    %1138 = vmatprep.subr.mxu0 0.0
    %1139 = vmatpush1.xpose.msra.mxu0 0.0
    %1140 = vmatprep.mubr.f32.mxu0 0.0
    %1141 = vmatmul.mubr.f32.gmra.mrb[0].mxu0 %v1072
    %v1142 = vpop.f32.mrb[0].mxu0
    %v1143 = vadd.f32 0.0, %v1142
    %v1144 = vpop.f32.mrb[0].mxu0
    %1145 = vdwg.mxu0
    %v1146 = vsel %vm169, %v1065, -inf
    %1147 = vmax.xlane.f32.xlu0 %v1146
    %v1148 = vpop.xlane.xlu0 %1147
    %v1149 = vsel %vm169, %v1143, -inf
    %1150 = vmax.xlane.f32.xlu0 %v1149
    %v1151 = vpop.xlane.xlu0 %1150
    %v1152 = vsub.f32 %v1065, %v1148
    %v1153 = vsub.f32 %v1143, %v1151
    %v1154 = vmul.f32 %v1152, 1.442695
    %v1155 = vpow.pop %v1154
    %v1156 = vmul.f32 %v1153, 1.442695
    %v1157 = vpow.pop %v1156
    %v1158 = vsel %vm169, %v1155, 0.0
    %1159 = vadd.xlane.f32.xlu0 %v1158
    %v1160 = vpop.xlane.xlu0 %1159
    %v1161 = vsel %vm169, %v1157, 0.0
    %1162 = vadd.xlane.f32.xlu0 %v1161
    %v1163 = vpop.xlane.xlu0 %1162
    %v1164 = vrcp.pop %v1160
    %v1165 = vrcp.pop %v1163
    %v1166 = vmul.f32 %v1155, %v1164
    %v1167 = vmul.f32 %v1157, %v1165
    %1168 = vrot.lane.b32.xlu0 %v158, 48
    %v1169 = vpop.permute.xlu0 %1168
    %v1172 = vsel %vm169, %v1166, 0
    %1174 = vmatprep.subr.mxu0 0.0
    %1175 = vmatpush1.msra.mxu0 %v1169
    %1176 = vmatprep.subr.mxu0 0.0
    %1177 = vmatpush1.msra.mxu0 0.0
    %1178 = vmatprep.subr.mxu0 0.0
    %1179 = vmatpush1.msra.mxu0 0.0
    %1180 = vmatprep.subr.mxu0 0.0
    %1181 = vmatpush1.msra.mxu0 0.0
    %1182 = vmatprep.subr.mxu0 0.0
    %1183 = vmatpush1.msra.mxu0 0.0
    %1184 = vmatprep.subr.mxu0 0.0
    %1185 = vmatpush1.msra.mxu0 0.0
    %1186 = vmatprep.subr.mxu0 0.0
    %1187 = vmatpush1.msra.mxu0 0.0
    %1188 = vmatprep.subr.mxu0 0.0
    %1189 = vmatpush1.msra.mxu0 0.0
    %1190 = vmatprep.subr.mxu0 0.0
    %1191 = vmatpush1.msra.mxu0 0.0
    %1192 = vmatprep.subr.mxu0 0.0
    %1193 = vmatpush1.msra.mxu0 0.0
    %1194 = vmatprep.subr.mxu0 0.0
    %1195 = vmatpush1.msra.mxu0 0.0
    %1196 = vmatprep.subr.mxu0 0.0
    %1197 = vmatpush1.msra.mxu0 0.0
    %1198 = vmatprep.subr.mxu0 0.0
    %1199 = vmatpush1.msra.mxu0 0.0
    %1200 = vmatprep.subr.mxu0 0.0
    %1201 = vmatpush1.msra.mxu0 0.0
    %1202 = vmatprep.subr.mxu0 0.0
    %1203 = vmatpush1.msra.mxu0 0.0
    %1204 = vmatprep.subr.mxu0 0.0
    %1205 = vmatpush1.msra.mxu0 0.0
    %1206 = vmatprep.subr.mxu0 0.0
    %1207 = vmatpush1.msra.mxu0 0.0
    %1208 = vmatprep.subr.mxu0 0.0
    %1209 = vmatpush1.msra.mxu0 0.0
    %1210 = vmatprep.subr.mxu0 0.0
    %1211 = vmatpush1.msra.mxu0 0.0
    %1212 = vmatprep.subr.mxu0 0.0
    %1213 = vmatpush1.msra.mxu0 0.0
    %1214 = vmatprep.subr.mxu0 0.0
    %1215 = vmatpush1.msra.mxu0 0.0
    %1216 = vmatprep.subr.mxu0 0.0
    %1217 = vmatpush1.msra.mxu0 0.0
    %1218 = vmatprep.subr.mxu0 0.0
    %1219 = vmatpush1.msra.mxu0 0.0
    %1220 = vmatprep.subr.mxu0 0.0
    %1221 = vmatpush1.msra.mxu0 0.0
    %1222 = vmatprep.subr.mxu0 0.0
    %1223 = vmatpush1.msra.mxu0 0.0
    %1224 = vmatprep.subr.mxu0 0.0
    %1225 = vmatpush1.msra.mxu0 0.0
    %1226 = vmatprep.subr.mxu0 0.0
    %1227 = vmatpush1.msra.mxu0 0.0
    %1228 = vmatprep.subr.mxu0 0.0
    %1229 = vmatpush1.msra.mxu0 0.0
    %1230 = vmatprep.subr.mxu0 0.0
    %1231 = vmatpush1.msra.mxu0 0.0
    %1232 = vmatprep.subr.mxu0 0.0
    %1233 = vmatpush1.msra.mxu0 0.0
    %1234 = vmatprep.subr.mxu0 0.0
    %1235 = vmatpush1.msra.mxu0 0.0
    %1236 = vmatprep.subr.mxu0 0.0
    %1237 = vmatpush1.msra.mxu0 0.0
    %1238 = vmatprep.mubr.f32.mxu0 0.0
    %1239 = vmatmul.mubr.f32.gmra.mrb[0].mxu0 %v1172
    %v1240 = vpop.f32.mrb[0].mxu0
    %v1241 = vadd.f32 0.0, %v1240
    %v1242 = vpop.f32.mrb[0].mxu0
    %1243 = vdwg.mxu0
    %1244 = vrot.lane.b32.xlu0 %v163, 48
    %v1245 = vpop.permute.xlu0 %1244
    %v1248 = vsel %vm169, %v1167, 0
    %1250 = vmatprep.subr.mxu0 0.0
    %1251 = vmatpush1.msra.mxu0 %v1245
    %1252 = vmatprep.subr.mxu0 0.0
    %1253 = vmatpush1.msra.mxu0 0.0
    %1254 = vmatprep.subr.mxu0 0.0
    %1255 = vmatpush1.msra.mxu0 0.0
    %1256 = vmatprep.subr.mxu0 0.0
    %1257 = vmatpush1.msra.mxu0 0.0
    %1258 = vmatprep.subr.mxu0 0.0
    %1259 = vmatpush1.msra.mxu0 0.0
    %1260 = vmatprep.subr.mxu0 0.0
    %1261 = vmatpush1.msra.mxu0 0.0
    %1262 = vmatprep.subr.mxu0 0.0
    %1263 = vmatpush1.msra.mxu0 0.0
    %1264 = vmatprep.subr.mxu0 0.0
    %1265 = vmatpush1.msra.mxu0 0.0
    %1266 = vmatprep.subr.mxu0 0.0
    %1267 = vmatpush1.msra.mxu0 0.0
    %1268 = vmatprep.subr.mxu0 0.0
    %1269 = vmatpush1.msra.mxu0 0.0
    %1270 = vmatprep.subr.mxu0 0.0
    %1271 = vmatpush1.msra.mxu0 0.0
    %1272 = vmatprep.subr.mxu0 0.0
    %1273 = vmatpush1.msra.mxu0 0.0
    %1274 = vmatprep.subr.mxu0 0.0
    %1275 = vmatpush1.msra.mxu0 0.0
    %1276 = vmatprep.subr.mxu0 0.0
    %1277 = vmatpush1.msra.mxu0 0.0
    %1278 = vmatprep.subr.mxu0 0.0
    %1279 = vmatpush1.msra.mxu0 0.0
    %1280 = vmatprep.subr.mxu0 0.0
    %1281 = vmatpush1.msra.mxu0 0.0
    %1282 = vmatprep.subr.mxu0 0.0
    %1283 = vmatpush1.msra.mxu0 0.0
    %1284 = vmatprep.subr.mxu0 0.0
    %1285 = vmatpush1.msra.mxu0 0.0
    %1286 = vmatprep.subr.mxu0 0.0
    %1287 = vmatpush1.msra.mxu0 0.0
    %1288 = vmatprep.subr.mxu0 0.0
    %1289 = vmatpush1.msra.mxu0 0.0
    %1290 = vmatprep.subr.mxu0 0.0
    %1291 = vmatpush1.msra.mxu0 0.0
    %1292 = vmatprep.subr.mxu0 0.0
    %1293 = vmatpush1.msra.mxu0 0.0
    %1294 = vmatprep.subr.mxu0 0.0
    %1295 = vmatpush1.msra.mxu0 0.0
    %1296 = vmatprep.subr.mxu0 0.0
    %1297 = vmatpush1.msra.mxu0 0.0
    %1298 = vmatprep.subr.mxu0 0.0
    %1299 = vmatpush1.msra.mxu0 0.0
    %1300 = vmatprep.subr.mxu0 0.0
    %1301 = vmatpush1.msra.mxu0 0.0
    %1302 = vmatprep.subr.mxu0 0.0
    %1303 = vmatpush1.msra.mxu0 0.0
    %1304 = vmatprep.subr.mxu0 0.0
    %1305 = vmatpush1.msra.mxu0 0.0
    %1306 = vmatprep.subr.mxu0 0.0
    %1307 = vmatpush1.msra.mxu0 0.0
    %1308 = vmatprep.subr.mxu0 0.0
    %1309 = vmatpush1.msra.mxu0 0.0
    %1310 = vmatprep.subr.mxu0 0.0
    %1311 = vmatpush1.msra.mxu0 0.0
    %1312 = vmatprep.subr.mxu0 0.0
    %1313 = vmatpush1.msra.mxu0 0.0
    %1314 = vmatprep.mubr.f32.mxu0 0.0
    %1315 = vmatmul.mubr.f32.gmra.mrb[0].mxu0 %v1248
    %v1316 = vpop.f32.mrb[0].mxu0
    %v1317 = vadd.f32 0.0, %v1316
    %v1318 = vpop.f32.mrb[0].mxu0
    %1319 = vdwg.mxu0
    %s1320 = scalar_lea.vmem %s4, 16
    %v1321 = vld [vmem:[%s1320] sm:$0xff]
    %v1323 = vsel %vm169, %v1241, 0
    %v1326 = vsel %vm169, %v1317, 0
    %1328 = vmatprep.subr.mxu0 0.0
    %1329 = vmatpush1.msra.mxu0 %v1321
    %1330 = vmatprep.subr.mxu0 0.0
    %1331 = vmatpush1.msra.mxu0 0.0
    %1332 = vmatprep.subr.mxu0 0.0
    %1333 = vmatpush1.msra.mxu0 0.0
    %1334 = vmatprep.subr.mxu0 0.0
    %1335 = vmatpush1.msra.mxu0 0.0
    %1336 = vmatprep.subr.mxu0 0.0
    %1337 = vmatpush1.msra.mxu0 0.0
    %1338 = vmatprep.subr.mxu0 0.0
    %1339 = vmatpush1.msra.mxu0 0.0
    %1340 = vmatprep.subr.mxu0 0.0
    %1341 = vmatpush1.msra.mxu0 0.0
    %1342 = vmatprep.subr.mxu0 0.0
    %1343 = vmatpush1.msra.mxu0 0.0
    %1344 = vmatprep.subr.mxu0 0.0
    %1345 = vmatpush1.msra.mxu0 0.0
    %1346 = vmatprep.subr.mxu0 0.0
    %1347 = vmatpush1.msra.mxu0 0.0
    %1348 = vmatprep.subr.mxu0 0.0
    %1349 = vmatpush1.msra.mxu0 0.0
    %1350 = vmatprep.subr.mxu0 0.0
    %1351 = vmatpush1.msra.mxu0 0.0
    %1352 = vmatprep.subr.mxu0 0.0
    %1353 = vmatpush1.msra.mxu0 0.0
    %1354 = vmatprep.subr.mxu0 0.0
    %1355 = vmatpush1.msra.mxu0 0.0
    %1356 = vmatprep.subr.mxu0 0.0
    %1357 = vmatpush1.msra.mxu0 0.0
    %1358 = vmatprep.subr.mxu0 0.0
    %1359 = vmatpush1.msra.mxu0 0.0
    %1360 = vmatprep.subr.mxu0 0.0
    %1361 = vmatpush1.msra.mxu0 0.0
    %1362 = vmatprep.subr.mxu0 0.0
    %1363 = vmatpush1.msra.mxu0 0.0
    %1364 = vmatprep.subr.mxu0 0.0
    %1365 = vmatpush1.msra.mxu0 0.0
    %1366 = vmatprep.subr.mxu0 0.0
    %1367 = vmatpush1.msra.mxu0 0.0
    %1368 = vmatprep.subr.mxu0 0.0
    %1369 = vmatpush1.msra.mxu0 0.0
    %1370 = vmatprep.subr.mxu0 0.0
    %1371 = vmatpush1.msra.mxu0 0.0
    %1372 = vmatprep.subr.mxu0 0.0
    %1373 = vmatpush1.msra.mxu0 0.0
    %1374 = vmatprep.subr.mxu0 0.0
    %1375 = vmatpush1.msra.mxu0 0.0
    %1376 = vmatprep.subr.mxu0 0.0
    %1377 = vmatpush1.msra.mxu0 0.0
    %1378 = vmatprep.subr.mxu0 0.0
    %1379 = vmatpush1.msra.mxu0 0.0
    %1380 = vmatprep.subr.mxu0 0.0
    %1381 = vmatpush1.msra.mxu0 0.0
    %1382 = vmatprep.subr.mxu0 0.0
    %1383 = vmatpush1.msra.mxu0 0.0
    %1384 = vmatprep.subr.mxu0 0.0
    %1385 = vmatpush1.msra.mxu0 0.0
    %1386 = vmatprep.subr.mxu0 0.0
    %1387 = vmatpush1.msra.mxu0 0.0
    %1388 = vmatprep.subr.mxu0 0.0
    %1389 = vmatpush1.msra.mxu0 0.0
    %1390 = vmatprep.subr.mxu0 0.0
    %1391 = vmatpush1.msra.mxu0 0.0
    %1392 = vmatprep.mubr.f32.mxu0 0.0
    %1393 = vmatmul.mubr.f32.gmra.mrb[0].mxu0 %v1323
    %v1394 = vpop.f32.mrb[0].mxu0
    %v1395 = vadd.f32 0.0, %v1394
    %v1396 = vpop.f32.mrb[0].mxu0
    %1397 = vmatprep.mubr.f32.mxu0 0.0
    %1398 = vmatmul.mubr.f32.gmra.mrb[0].mxu0 %v1326
    %v1399 = vpop.f32.mrb[0].mxu0
    %v1400 = vadd.f32 0.0, %v1399
    %v1401 = vpop.f32.mrb[0].mxu0
    %1402 = vdwg.mxu0
    %v1403 = vadd.f32 %v982, %v1395
    %v1404 = vadd.f32 %v987, %v1400
    %1405 = vrot.lane.b32.xlu0 %v158, 104
    %v1406 = vpop.permute.xlu0 %1405
    %1407 = vrot.lane.b32.xlu0 %v158, 72
    %v1408 = vpop.permute.xlu0 %1407
    %v1409 = vsel %vm169, %v1406, 0
    %v1411 = vsel %vm169, %v1408, 0
    %1413 = vmatprep.subr.mxu0 0.0
    %1414 = vmatpush1.xpose.msra.mxu0 %v1411
    %1415 = vmatprep.subr.mxu0 0.0
    %1416 = vmatpush1.xpose.msra.mxu0 0.0
    %1417 = vmatprep.subr.mxu0 0.0
    %1418 = vmatpush1.xpose.msra.mxu0 0.0
    %1419 = vmatprep.subr.mxu0 0.0
    %1420 = vmatpush1.xpose.msra.mxu0 0.0
    %1421 = vmatprep.subr.mxu0 0.0
    %1422 = vmatpush1.xpose.msra.mxu0 0.0
    %1423 = vmatprep.subr.mxu0 0.0
    %1424 = vmatpush1.xpose.msra.mxu0 0.0
    %1425 = vmatprep.subr.mxu0 0.0
    %1426 = vmatpush1.xpose.msra.mxu0 0.0
    %1427 = vmatprep.subr.mxu0 0.0
    %1428 = vmatpush1.xpose.msra.mxu0 0.0
    %1429 = vmatprep.subr.mxu0 0.0
    %1430 = vmatpush1.xpose.msra.mxu0 0.0
    %1431 = vmatprep.subr.mxu0 0.0
    %1432 = vmatpush1.xpose.msra.mxu0 0.0
    %1433 = vmatprep.subr.mxu0 0.0
    %1434 = vmatpush1.xpose.msra.mxu0 0.0
    %1435 = vmatprep.subr.mxu0 0.0
    %1436 = vmatpush1.xpose.msra.mxu0 0.0
    %1437 = vmatprep.subr.mxu0 0.0
    %1438 = vmatpush1.xpose.msra.mxu0 0.0
    %1439 = vmatprep.subr.mxu0 0.0
    %1440 = vmatpush1.xpose.msra.mxu0 0.0
    %1441 = vmatprep.subr.mxu0 0.0
    %1442 = vmatpush1.xpose.msra.mxu0 0.0
    %1443 = vmatprep.subr.mxu0 0.0
    %1444 = vmatpush1.xpose.msra.mxu0 0.0
    %1445 = vmatprep.subr.mxu0 0.0
    %1446 = vmatpush1.xpose.msra.mxu0 0.0
    %1447 = vmatprep.subr.mxu0 0.0
    %1448 = vmatpush1.xpose.msra.mxu0 0.0
    %1449 = vmatprep.subr.mxu0 0.0
    %1450 = vmatpush1.xpose.msra.mxu0 0.0
    %1451 = vmatprep.subr.mxu0 0.0
    %1452 = vmatpush1.xpose.msra.mxu0 0.0
    %1453 = vmatprep.subr.mxu0 0.0
    %1454 = vmatpush1.xpose.msra.mxu0 0.0
    %1455 = vmatprep.subr.mxu0 0.0
    %1456 = vmatpush1.xpose.msra.mxu0 0.0
    %1457 = vmatprep.subr.mxu0 0.0
    %1458 = vmatpush1.xpose.msra.mxu0 0.0
    %1459 = vmatprep.subr.mxu0 0.0
    %1460 = vmatpush1.xpose.msra.mxu0 0.0
    %1461 = vmatprep.subr.mxu0 0.0
    %1462 = vmatpush1.xpose.msra.mxu0 0.0
    %1463 = vmatprep.subr.mxu0 0.0
    %1464 = vmatpush1.xpose.msra.mxu0 0.0
    %1465 = vmatprep.subr.mxu0 0.0
    %1466 = vmatpush1.xpose.msra.mxu0 0.0
    %1467 = vmatprep.subr.mxu0 0.0
    %1468 = vmatpush1.xpose.msra.mxu0 0.0
    %1469 = vmatprep.subr.mxu0 0.0
    %1470 = vmatpush1.xpose.msra.mxu0 0.0
    %1471 = vmatprep.subr.mxu0 0.0
    %1472 = vmatpush1.xpose.msra.mxu0 0.0
    %1473 = vmatprep.subr.mxu0 0.0
    %1474 = vmatpush1.xpose.msra.mxu0 0.0
    %1475 = vmatprep.subr.mxu0 0.0
    %1476 = vmatpush1.xpose.msra.mxu0 0.0
    %1477 = vmatprep.mubr.f32.mxu0 0.0
    %1478 = vmatmul.mubr.f32.gmra.mrb[0].mxu0 %v1409
    %v1479 = vpop.f32.mrb[0].mxu0
    %v1480 = vadd.f32 0.0, %v1479
    %v1481 = vpop.f32.mrb[0].mxu0
    %1482 = vdwg.mxu0
    %1483 = vrot.lane.b32.xlu0 %v163, 104
    %v1484 = vpop.permute.xlu0 %1483
    %1485 = vrot.lane.b32.xlu0 %v163, 72
    %v1486 = vpop.permute.xlu0 %1485
    %v1487 = vsel %vm169, %v1484, 0
    %v1489 = vsel %vm169, %v1486, 0
    %1491 = vmatprep.subr.mxu0 0.0
    %1492 = vmatpush1.xpose.msra.mxu0 %v1489
    %1493 = vmatprep.subr.mxu0 0.0
    %1494 = vmatpush1.xpose.msra.mxu0 0.0
    %1495 = vmatprep.subr.mxu0 0.0
    %1496 = vmatpush1.xpose.msra.mxu0 0.0
    %1497 = vmatprep.subr.mxu0 0.0
    %1498 = vmatpush1.xpose.msra.mxu0 0.0
    %1499 = vmatprep.subr.mxu0 0.0
    %1500 = vmatpush1.xpose.msra.mxu0 0.0
    %1501 = vmatprep.subr.mxu0 0.0
    %1502 = vmatpush1.xpose.msra.mxu0 0.0
    %1503 = vmatprep.subr.mxu0 0.0
    %1504 = vmatpush1.xpose.msra.mxu0 0.0
    %1505 = vmatprep.subr.mxu0 0.0
    %1506 = vmatpush1.xpose.msra.mxu0 0.0
    %1507 = vmatprep.subr.mxu0 0.0
    %1508 = vmatpush1.xpose.msra.mxu0 0.0
    %1509 = vmatprep.subr.mxu0 0.0
    %1510 = vmatpush1.xpose.msra.mxu0 0.0
    %1511 = vmatprep.subr.mxu0 0.0
    %1512 = vmatpush1.xpose.msra.mxu0 0.0
    %1513 = vmatprep.subr.mxu0 0.0
    %1514 = vmatpush1.xpose.msra.mxu0 0.0
    %1515 = vmatprep.subr.mxu0 0.0
    %1516 = vmatpush1.xpose.msra.mxu0 0.0
    %1517 = vmatprep.subr.mxu0 0.0
    %1518 = vmatpush1.xpose.msra.mxu0 0.0
    %1519 = vmatprep.subr.mxu0 0.0
    %1520 = vmatpush1.xpose.msra.mxu0 0.0
    %1521 = vmatprep.subr.mxu0 0.0
    %1522 = vmatpush1.xpose.msra.mxu0 0.0
    %1523 = vmatprep.subr.mxu0 0.0
    %1524 = vmatpush1.xpose.msra.mxu0 0.0
    %1525 = vmatprep.subr.mxu0 0.0
    %1526 = vmatpush1.xpose.msra.mxu0 0.0
    %1527 = vmatprep.subr.mxu0 0.0
    %1528 = vmatpush1.xpose.msra.mxu0 0.0
    %1529 = vmatprep.subr.mxu0 0.0
    %1530 = vmatpush1.xpose.msra.mxu0 0.0
    %1531 = vmatprep.subr.mxu0 0.0
    %1532 = vmatpush1.xpose.msra.mxu0 0.0
    %1533 = vmatprep.subr.mxu0 0.0
    %1534 = vmatpush1.xpose.msra.mxu0 0.0
    %1535 = vmatprep.subr.mxu0 0.0
    %1536 = vmatpush1.xpose.msra.mxu0 0.0
    %1537 = vmatprep.subr.mxu0 0.0
    %1538 = vmatpush1.xpose.msra.mxu0 0.0
    %1539 = vmatprep.subr.mxu0 0.0
    %1540 = vmatpush1.xpose.msra.mxu0 0.0
    %1541 = vmatprep.subr.mxu0 0.0
    %1542 = vmatpush1.xpose.msra.mxu0 0.0
    %1543 = vmatprep.subr.mxu0 0.0
    %1544 = vmatpush1.xpose.msra.mxu0 0.0
    %1545 = vmatprep.subr.mxu0 0.0
    %1546 = vmatpush1.xpose.msra.mxu0 0.0
    %1547 = vmatprep.subr.mxu0 0.0
    %1548 = vmatpush1.xpose.msra.mxu0 0.0
    %1549 = vmatprep.subr.mxu0 0.0
    %1550 = vmatpush1.xpose.msra.mxu0 0.0
    %1551 = vmatprep.subr.mxu0 0.0
    %1552 = vmatpush1.xpose.msra.mxu0 0.0
    %1553 = vmatprep.subr.mxu0 0.0
    %1554 = vmatpush1.xpose.msra.mxu0 0.0
    %1555 = vmatprep.mubr.f32.mxu0 0.0
    %1556 = vmatmul.mubr.f32.gmra.mrb[0].mxu0 %v1487
    %v1557 = vpop.f32.mrb[0].mxu0
    %v1558 = vadd.f32 0.0, %v1557
    %v1559 = vpop.f32.mrb[0].mxu0
    %1560 = vdwg.mxu0
    %v1561 = vsel %vm169, %v1480, -inf
    %1562 = vmax.xlane.f32.xlu0 %v1561
    %v1563 = vpop.xlane.xlu0 %1562
    %v1564 = vsel %vm169, %v1558, -inf
    %1565 = vmax.xlane.f32.xlu0 %v1564
    %v1566 = vpop.xlane.xlu0 %1565
    %v1567 = vsub.f32 %v1480, %v1563
    %v1568 = vsub.f32 %v1558, %v1566
    %v1569 = vmul.f32 %v1567, 1.442695
    %v1570 = vpow.pop %v1569
    %v1571 = vmul.f32 %v1568, 1.442695
    %v1572 = vpow.pop %v1571
    %v1573 = vsel %vm169, %v1570, 0.0
    %1574 = vadd.xlane.f32.xlu0 %v1573
    %v1575 = vpop.xlane.xlu0 %1574
    %v1576 = vsel %vm169, %v1572, 0.0
    %1577 = vadd.xlane.f32.xlu0 %v1576
    %v1578 = vpop.xlane.xlu0 %1577
    %v1579 = vrcp.pop %v1575
    %v1580 = vrcp.pop %v1578
    %v1581 = vmul.f32 %v1570, %v1579
    %v1582 = vmul.f32 %v1572, %v1580
    %1583 = vrot.lane.b32.xlu0 %v158, 40
    %v1584 = vpop.permute.xlu0 %1583
    %v1587 = vsel %vm169, %v1581, 0
    %1589 = vmatprep.subr.mxu0 0.0
    %1590 = vmatpush1.msra.mxu0 %v1584
    %1591 = vmatprep.subr.mxu0 0.0
    %1592 = vmatpush1.msra.mxu0 0.0
    %1593 = vmatprep.subr.mxu0 0.0
    %1594 = vmatpush1.msra.mxu0 0.0
    %1595 = vmatprep.subr.mxu0 0.0
    %1596 = vmatpush1.msra.mxu0 0.0
    %1597 = vmatprep.subr.mxu0 0.0
    %1598 = vmatpush1.msra.mxu0 0.0
    %1599 = vmatprep.subr.mxu0 0.0
    %1600 = vmatpush1.msra.mxu0 0.0
    %1601 = vmatprep.subr.mxu0 0.0
    %1602 = vmatpush1.msra.mxu0 0.0
    %1603 = vmatprep.subr.mxu0 0.0
    %1604 = vmatpush1.msra.mxu0 0.0
    %1605 = vmatprep.subr.mxu0 0.0
    %1606 = vmatpush1.msra.mxu0 0.0
    %1607 = vmatprep.subr.mxu0 0.0
    %1608 = vmatpush1.msra.mxu0 0.0
    %1609 = vmatprep.subr.mxu0 0.0
    %1610 = vmatpush1.msra.mxu0 0.0
    %1611 = vmatprep.subr.mxu0 0.0
    %1612 = vmatpush1.msra.mxu0 0.0
    %1613 = vmatprep.subr.mxu0 0.0
    %1614 = vmatpush1.msra.mxu0 0.0
    %1615 = vmatprep.subr.mxu0 0.0
    %1616 = vmatpush1.msra.mxu0 0.0
    %1617 = vmatprep.subr.mxu0 0.0
    %1618 = vmatpush1.msra.mxu0 0.0
    %1619 = vmatprep.subr.mxu0 0.0
    %1620 = vmatpush1.msra.mxu0 0.0
    %1621 = vmatprep.subr.mxu0 0.0
    %1622 = vmatpush1.msra.mxu0 0.0
    %1623 = vmatprep.subr.mxu0 0.0
    %1624 = vmatpush1.msra.mxu0 0.0
    %1625 = vmatprep.subr.mxu0 0.0
    %1626 = vmatpush1.msra.mxu0 0.0
    %1627 = vmatprep.subr.mxu0 0.0
    %1628 = vmatpush1.msra.mxu0 0.0
    %1629 = vmatprep.subr.mxu0 0.0
    %1630 = vmatpush1.msra.mxu0 0.0
    %1631 = vmatprep.subr.mxu0 0.0
    %1632 = vmatpush1.msra.mxu0 0.0
    %1633 = vmatprep.subr.mxu0 0.0
    %1634 = vmatpush1.msra.mxu0 0.0
    %1635 = vmatprep.subr.mxu0 0.0
    %1636 = vmatpush1.msra.mxu0 0.0
    %1637 = vmatprep.subr.mxu0 0.0
    %1638 = vmatpush1.msra.mxu0 0.0
    %1639 = vmatprep.subr.mxu0 0.0
    %1640 = vmatpush1.msra.mxu0 0.0
    %1641 = vmatprep.subr.mxu0 0.0
    %1642 = vmatpush1.msra.mxu0 0.0
    %1643 = vmatprep.subr.mxu0 0.0
    %1644 = vmatpush1.msra.mxu0 0.0
    %1645 = vmatprep.subr.mxu0 0.0
    %1646 = vmatpush1.msra.mxu0 0.0
    %1647 = vmatprep.subr.mxu0 0.0
    %1648 = vmatpush1.msra.mxu0 0.0
    %1649 = vmatprep.subr.mxu0 0.0
    %1650 = vmatpush1.msra.mxu0 0.0
    %1651 = vmatprep.subr.mxu0 0.0
    %1652 = vmatpush1.msra.mxu0 0.0
    %1653 = vmatprep.mubr.f32.mxu0 0.0
    %1654 = vmatmul.mubr.f32.gmra.mrb[0].mxu0 %v1587
    %v1655 = vpop.f32.mrb[0].mxu0
    %v1656 = vadd.f32 0.0, %v1655
    %v1657 = vpop.f32.mrb[0].mxu0
    %1658 = vdwg.mxu0
    %1659 = vrot.lane.b32.xlu0 %v163, 40
    %v1660 = vpop.permute.xlu0 %1659
    %v1663 = vsel %vm169, %v1582, 0
    %1665 = vmatprep.subr.mxu0 0.0
    %1666 = vmatpush1.msra.mxu0 %v1660
    %1667 = vmatprep.subr.mxu0 0.0
    %1668 = vmatpush1.msra.mxu0 0.0
    %1669 = vmatprep.subr.mxu0 0.0
    %1670 = vmatpush1.msra.mxu0 0.0
    %1671 = vmatprep.subr.mxu0 0.0
    %1672 = vmatpush1.msra.mxu0 0.0
    %1673 = vmatprep.subr.mxu0 0.0
    %1674 = vmatpush1.msra.mxu0 0.0
    %1675 = vmatprep.subr.mxu0 0.0
    %1676 = vmatpush1.msra.mxu0 0.0
    %1677 = vmatprep.subr.mxu0 0.0
    %1678 = vmatpush1.msra.mxu0 0.0
    %1679 = vmatprep.subr.mxu0 0.0
    %1680 = vmatpush1.msra.mxu0 0.0
    %1681 = vmatprep.subr.mxu0 0.0
    %1682 = vmatpush1.msra.mxu0 0.0
    %1683 = vmatprep.subr.mxu0 0.0
    %1684 = vmatpush1.msra.mxu0 0.0
    %1685 = vmatprep.subr.mxu0 0.0
    %1686 = vmatpush1.msra.mxu0 0.0
    %1687 = vmatprep.subr.mxu0 0.0
    %1688 = vmatpush1.msra.mxu0 0.0
    %1689 = vmatprep.subr.mxu0 0.0
    %1690 = vmatpush1.msra.mxu0 0.0
    %1691 = vmatprep.subr.mxu0 0.0
    %1692 = vmatpush1.msra.mxu0 0.0
    %1693 = vmatprep.subr.mxu0 0.0
    %1694 = vmatpush1.msra.mxu0 0.0
    %1695 = vmatprep.subr.mxu0 0.0
    %1696 = vmatpush1.msra.mxu0 0.0
    %1697 = vmatprep.subr.mxu0 0.0
    %1698 = vmatpush1.msra.mxu0 0.0
    %1699 = vmatprep.subr.mxu0 0.0
    %1700 = vmatpush1.msra.mxu0 0.0
    %1701 = vmatprep.subr.mxu0 0.0
    %1702 = vmatpush1.msra.mxu0 0.0
    %1703 = vmatprep.subr.mxu0 0.0
    %1704 = vmatpush1.msra.mxu0 0.0
    %1705 = vmatprep.subr.mxu0 0.0
    %1706 = vmatpush1.msra.mxu0 0.0
    %1707 = vmatprep.subr.mxu0 0.0
    %1708 = vmatpush1.msra.mxu0 0.0
    %1709 = vmatprep.subr.mxu0 0.0
    %1710 = vmatpush1.msra.mxu0 0.0
    %1711 = vmatprep.subr.mxu0 0.0
    %1712 = vmatpush1.msra.mxu0 0.0
    %1713 = vmatprep.subr.mxu0 0.0
    %1714 = vmatpush1.msra.mxu0 0.0
    %1715 = vmatprep.subr.mxu0 0.0
    %1716 = vmatpush1.msra.mxu0 0.0
    %1717 = vmatprep.subr.mxu0 0.0
    %1718 = vmatpush1.msra.mxu0 0.0
    %1719 = vmatprep.subr.mxu0 0.0
    %1720 = vmatpush1.msra.mxu0 0.0
    %1721 = vmatprep.subr.mxu0 0.0
    %1722 = vmatpush1.msra.mxu0 0.0
    %1723 = vmatprep.subr.mxu0 0.0
    %1724 = vmatpush1.msra.mxu0 0.0
    %1725 = vmatprep.subr.mxu0 0.0
    %1726 = vmatpush1.msra.mxu0 0.0
    %1727 = vmatprep.subr.mxu0 0.0
    %1728 = vmatpush1.msra.mxu0 0.0
    %1729 = vmatprep.mubr.f32.mxu0 0.0
    %1730 = vmatmul.mubr.f32.gmra.mrb[0].mxu0 %v1663
    %v1731 = vpop.f32.mrb[0].mxu0
    %v1732 = vadd.f32 0.0, %v1731
    %v1733 = vpop.f32.mrb[0].mxu0
    %1734 = vdwg.mxu0
    %s1735 = scalar_lea.vmem %s4, 24
    %v1736 = vld [vmem:[%s1735] sm:$0xff]
    %v1738 = vsel %vm169, %v1656, 0
    %v1741 = vsel %vm169, %v1732, 0
    %1743 = vmatprep.subr.mxu0 0.0
    %1744 = vmatpush1.msra.mxu0 %v1736
    %1745 = vmatprep.subr.mxu0 0.0
    %1746 = vmatpush1.msra.mxu0 0.0
    %1747 = vmatprep.subr.mxu0 0.0
    %1748 = vmatpush1.msra.mxu0 0.0
    %1749 = vmatprep.subr.mxu0 0.0
    %1750 = vmatpush1.msra.mxu0 0.0
    %1751 = vmatprep.subr.mxu0 0.0
    %1752 = vmatpush1.msra.mxu0 0.0
    %1753 = vmatprep.subr.mxu0 0.0
    %1754 = vmatpush1.msra.mxu0 0.0
    %1755 = vmatprep.subr.mxu0 0.0
    %1756 = vmatpush1.msra.mxu0 0.0
    %1757 = vmatprep.subr.mxu0 0.0
    %1758 = vmatpush1.msra.mxu0 0.0
    %1759 = vmatprep.subr.mxu0 0.0
    %1760 = vmatpush1.msra.mxu0 0.0
    %1761 = vmatprep.subr.mxu0 0.0
    %1762 = vmatpush1.msra.mxu0 0.0
    %1763 = vmatprep.subr.mxu0 0.0
    %1764 = vmatpush1.msra.mxu0 0.0
    %1765 = vmatprep.subr.mxu0 0.0
    %1766 = vmatpush1.msra.mxu0 0.0
    %1767 = vmatprep.subr.mxu0 0.0
    %1768 = vmatpush1.msra.mxu0 0.0
    %1769 = vmatprep.subr.mxu0 0.0
    %1770 = vmatpush1.msra.mxu0 0.0
    %1771 = vmatprep.subr.mxu0 0.0
    %1772 = vmatpush1.msra.mxu0 0.0
    %1773 = vmatprep.subr.mxu0 0.0
    %1774 = vmatpush1.msra.mxu0 0.0
    %1775 = vmatprep.subr.mxu0 0.0
    %1776 = vmatpush1.msra.mxu0 0.0
    %1777 = vmatprep.subr.mxu0 0.0
    %1778 = vmatpush1.msra.mxu0 0.0
    %1779 = vmatprep.subr.mxu0 0.0
    %1780 = vmatpush1.msra.mxu0 0.0
    %1781 = vmatprep.subr.mxu0 0.0
    %1782 = vmatpush1.msra.mxu0 0.0
    %1783 = vmatprep.subr.mxu0 0.0
    %1784 = vmatpush1.msra.mxu0 0.0
    %1785 = vmatprep.subr.mxu0 0.0
    %1786 = vmatpush1.msra.mxu0 0.0
    %1787 = vmatprep.subr.mxu0 0.0
    %1788 = vmatpush1.msra.mxu0 0.0
    %1789 = vmatprep.subr.mxu0 0.0
    %1790 = vmatpush1.msra.mxu0 0.0
    %1791 = vmatprep.subr.mxu0 0.0
    %1792 = vmatpush1.msra.mxu0 0.0
    %1793 = vmatprep.subr.mxu0 0.0
    %1794 = vmatpush1.msra.mxu0 0.0
    %1795 = vmatprep.subr.mxu0 0.0
    %1796 = vmatpush1.msra.mxu0 0.0
    %1797 = vmatprep.subr.mxu0 0.0
    %1798 = vmatpush1.msra.mxu0 0.0
    %1799 = vmatprep.subr.mxu0 0.0
    %1800 = vmatpush1.msra.mxu0 0.0
    %1801 = vmatprep.subr.mxu0 0.0
    %1802 = vmatpush1.msra.mxu0 0.0
    %1803 = vmatprep.subr.mxu0 0.0
    %1804 = vmatpush1.msra.mxu0 0.0
    %1805 = vmatprep.subr.mxu0 0.0
    %1806 = vmatpush1.msra.mxu0 0.0
    %1807 = vmatprep.mubr.f32.mxu0 0.0
    %1808 = vmatmul.mubr.f32.gmra.mrb[0].mxu0 %v1738
    %v1809 = vpop.f32.mrb[0].mxu0
    %v1810 = vadd.f32 0.0, %v1809
    %v1811 = vpop.f32.mrb[0].mxu0
    %1812 = vmatprep.mubr.f32.mxu0 0.0
    %1813 = vmatmul.mubr.f32.gmra.mrb[0].mxu0 %v1741
    %v1814 = vpop.f32.mrb[0].mxu0
    %v1815 = vadd.f32 0.0, %v1814
    %v1816 = vpop.f32.mrb[0].mxu0
    %1817 = vdwg.mxu0
    %v1818 = vadd.f32 %v1403, %v1810
    %v1819 = vadd.f32 %v1404, %v1815
    %v1820 = vadd.f32 %v27, %v1818
    %v1821 = vadd.f32 %v28, %v1819
    %v1822 = vlaneseq
    %v1823 = vshrl.u32 %v1822, 7
    %v1824 = vsub.s32 0, %v1823
    %v1825 = vrot.slane %v33, %v1824
    %v1826 = vadd.f32 %v1820, %v1825
    %v1827 = vadd.f32 %v1821, %v1825
    %v1828 = vsel %vm37, %v1826, 0.0
    %1829 = vadd.xlane.f32.xlu0 %v1828
    %v1830 = vpop.xlane.xlu0 %1829
    %v1831 = vsel %vm37, %v1827, 0.0
    %1832 = vadd.xlane.f32.xlu0 %v1831
    %v1833 = vpop.xlane.xlu0 %1832
    %v1834 = vmul.f32 %v1830, %v44
    %v1835 = vmul.f32 %v1833, %v44
    %v1836 = vsub.f32 %v1826, %v1834
    %v1837 = vsub.f32 %v1827, %v1835
    %v1838 = vmul.f32 %v1836, %v1836
    %v1839 = vmul.f32 %v1837, %v1837
    %v1840 = vsel %vm37, %v1838, 0.0
    %1841 = vadd.xlane.f32.xlu0 %v1840
    %v1842 = vpop.xlane.xlu0 %1841
    %v1843 = vsel %vm37, %v1839, 0.0
    %1844 = vadd.xlane.f32.xlu0 %v1843
    %v1845 = vpop.xlane.xlu0 %1844
    %v1846 = vmul.f32 %v1842, %v44
    %v1847 = vmul.f32 %v1845, %v44
    %v1848 = vadd.f32 %v1846, 1e-05
    %v1849 = vadd.f32 %v1847, 1e-05
    %v1850 = vrsqrt.pop %v1848
    %v1851 = vrsqrt.pop %v1849
    %v1852 = vmul.f32 %v1836, %v1850
    %v1853 = vmul.f32 %v1837, %v1851
    %v1854 = vlaneseq
    %v1855 = vshrl.u32 %v1854, 7
    %v1856 = vsub.s32 0, %v1855
    %v1857 = vrot.slane %v31, %v1856
    %v1858 = vmul.f32 %v1852, %v1857
    %v1859 = vmul.f32 %v1853, %v1857
    %v1860 = vlaneseq
    %v1861 = vshrl.u32 %v1860, 7
    %v1862 = vsub.s32 0, %v1861
    %v1863 = vrot.slane %v32, %v1862
    %v1864 = vadd.f32 %v1858, %v1863
    %v1865 = vadd.f32 %v1859, %v1863
    %v1866 = vld [vmem:[%s5] sm:$0xff]
    %v1867 = vld [vmem:[%s5 + $0x8] sm:$0xff]
    %v1868 = vld [vmem:[%s5 + $0x10] sm:$0xff]
    %v1869 = vld [vmem:[%s5 + $0x18] sm:$0xff]
    %v1870 = vlaneseq
    %v1871 = vshrl.u32 %v1870, 7
    %v1872 = vsub.s32 0, %v1871
    %v1873 = vrot.slane %v36, %v1872
    %v1875 = vsel %vm37, %v1864, 0
    %v1878 = vsel %vm37, %v1865, 0
    %1880 = vmatprep.subr.mxu0 0.0
    %1881 = vmatpush1.msra.mxu0 %v1866
    %1882 = vmatprep.subr.mxu0 0.0
    %1883 = vmatpush1.msra.mxu0 %v1867
    %1884 = vmatprep.subr.mxu0 0.0
    %1885 = vmatpush1.msra.mxu0 %v1868
    %1886 = vmatprep.subr.mxu0 0.0
    %1887 = vmatpush1.msra.mxu0 %v1869
    %1888 = vmatprep.subr.mxu0 0.0
    %1889 = vmatpush1.msra.mxu0 0.0
    %1890 = vmatprep.subr.mxu0 0.0
    %1891 = vmatpush1.msra.mxu0 0.0
    %1892 = vmatprep.subr.mxu0 0.0
    %1893 = vmatpush1.msra.mxu0 0.0
    %1894 = vmatprep.subr.mxu0 0.0
    %1895 = vmatpush1.msra.mxu0 0.0
    %1896 = vmatprep.subr.mxu0 0.0
    %1897 = vmatpush1.msra.mxu0 0.0
    %1898 = vmatprep.subr.mxu0 0.0
    %1899 = vmatpush1.msra.mxu0 0.0
    %1900 = vmatprep.subr.mxu0 0.0
    %1901 = vmatpush1.msra.mxu0 0.0
    %1902 = vmatprep.subr.mxu0 0.0
    %1903 = vmatpush1.msra.mxu0 0.0
    %1904 = vmatprep.subr.mxu0 0.0
    %1905 = vmatpush1.msra.mxu0 0.0
    %1906 = vmatprep.subr.mxu0 0.0
    %1907 = vmatpush1.msra.mxu0 0.0
    %1908 = vmatprep.subr.mxu0 0.0
    %1909 = vmatpush1.msra.mxu0 0.0
    %1910 = vmatprep.subr.mxu0 0.0
    %1911 = vmatpush1.msra.mxu0 0.0
    %1912 = vmatprep.subr.mxu0 0.0
    %1913 = vmatpush1.msra.mxu0 0.0
    %1914 = vmatprep.subr.mxu0 0.0
    %1915 = vmatpush1.msra.mxu0 0.0
    %1916 = vmatprep.subr.mxu0 0.0
    %1917 = vmatpush1.msra.mxu0 0.0
    %1918 = vmatprep.subr.mxu0 0.0
    %1919 = vmatpush1.msra.mxu0 0.0
    %1920 = vmatprep.subr.mxu0 0.0
    %1921 = vmatpush1.msra.mxu0 0.0
    %1922 = vmatprep.subr.mxu0 0.0
    %1923 = vmatpush1.msra.mxu0 0.0
    %1924 = vmatprep.subr.mxu0 0.0
    %1925 = vmatpush1.msra.mxu0 0.0
    %1926 = vmatprep.subr.mxu0 0.0
    %1927 = vmatpush1.msra.mxu0 0.0
    %1928 = vmatprep.subr.mxu0 0.0
    %1929 = vmatpush1.msra.mxu0 0.0
    %1930 = vmatprep.subr.mxu0 0.0
    %1931 = vmatpush1.msra.mxu0 0.0
    %1932 = vmatprep.subr.mxu0 0.0
    %1933 = vmatpush1.msra.mxu0 0.0
    %1934 = vmatprep.subr.mxu0 0.0
    %1935 = vmatpush1.msra.mxu0 0.0
    %1936 = vmatprep.subr.mxu0 0.0
    %1937 = vmatpush1.msra.mxu0 0.0
    %1938 = vmatprep.subr.mxu0 0.0
    %1939 = vmatpush1.msra.mxu0 0.0
    %1940 = vmatprep.subr.mxu0 0.0
    %1941 = vmatpush1.msra.mxu0 0.0
    %1942 = vmatprep.subr.mxu0 0.0
    %1943 = vmatpush1.msra.mxu0 0.0
    %1944 = vmatprep.mubr.f32.mxu0 0.0
    %1945 = vmatmul.mubr.f32.gmra.mrb[0].mxu0 %v1875
    %v1946 = vpop.f32.mrb[0].mxu0
    %v1947 = vadd.f32 %v1873, %v1946
    %v1948 = vpop.f32.mrb[0].mxu0
    %1949 = vmatprep.mubr.f32.mxu0 0.0
    %1950 = vmatmul.mubr.f32.gmra.mrb[0].mxu0 %v1878
    %v1951 = vpop.f32.mrb[0].mxu0
    %v1952 = vadd.f32 %v1873, %v1951
    %v1953 = vpop.f32.mrb[0].mxu0
    %1954 = vdwg.mxu0
    %v1955 = vmul.f32 %v1947, 0.5
    %v1956 = vmul.f32 %v1952, 0.5
    %v1957 = vmul.f32 %v1947, 0.70710677
    %v1958 = vmul.f32 %v1952, 0.70710677
    %v1959 = verf.f32.pop %v1957
    %v1960 = verf.f32.pop %v1958
    %v1961 = vadd.f32 %v1959, 1.0
    %v1962 = vadd.f32 %v1960, 1.0
    %v1963 = vmul.f32 %v1955, %v1961
    %v1964 = vmul.f32 %v1956, %v1962
    %v1965 = vld [vmem:[%s6] sm:$0xff]
    %v1966 = vld [vmem:[%s6 + $0x8] sm:$0xff]
    %v1967 = vld [vmem:[%s6 + $0x10] sm:$0xff]
    %v1968 = vld [vmem:[%s6 + $0x18] sm:$0xff]
    %v1969 = vld [vmem:[%s6 + $0x20] sm:$0xff]
    %v1970 = vld [vmem:[%s6 + $0x28] sm:$0xff]
    %v1971 = vld [vmem:[%s6 + $0x30] sm:$0xff]
    %v1972 = vld [vmem:[%s6 + $0x38] sm:$0xff]
    %v1973 = vld [vmem:[%s6 + $0x40] sm:$0xff]
    %v1974 = vld [vmem:[%s6 + $0x48] sm:$0xff]
    %v1975 = vld [vmem:[%s6 + $0x50] sm:$0xff]
    %v1976 = vld [vmem:[%s6 + $0x58] sm:$0xff]
    %v1977 = vld [vmem:[%s6 + $0x60] sm:$0xff]
    %v1978 = vld [vmem:[%s6 + $0x68] sm:$0xff]
    %v1979 = vld [vmem:[%s6 + $0x70] sm:$0xff]
    %v1980 = vld [vmem:[%s6 + $0x78] sm:$0xff]
    %v1981 = vlaneseq
    %v1982 = vshrl.u32 %v1981, 7
    %v1983 = vsub.s32 0, %v1982
    %v1984 = vrot.slane %v34, %v1983
    %1985 = vmatprep.subr.mxu0 0.0
    %1986 = vmatpush1.msra.mxu0 %v1965
    %1987 = vmatprep.subr.mxu0 0.0
    %1988 = vmatpush1.msra.mxu0 %v1966
    %1989 = vmatprep.subr.mxu0 0.0
    %1990 = vmatpush1.msra.mxu0 %v1967
    %1991 = vmatprep.subr.mxu0 0.0
    %1992 = vmatpush1.msra.mxu0 %v1968
    %1993 = vmatprep.subr.mxu0 0.0
    %1994 = vmatpush1.msra.mxu0 %v1969
    %1995 = vmatprep.subr.mxu0 0.0
    %1996 = vmatpush1.msra.mxu0 %v1970
    %1997 = vmatprep.subr.mxu0 0.0
    %1998 = vmatpush1.msra.mxu0 %v1971
    %1999 = vmatprep.subr.mxu0 0.0
    %2000 = vmatpush1.msra.mxu0 %v1972
    %2001 = vmatprep.subr.mxu0 0.0
    %2002 = vmatpush1.msra.mxu0 %v1973
    %2003 = vmatprep.subr.mxu0 0.0
    %2004 = vmatpush1.msra.mxu0 %v1974
    %2005 = vmatprep.subr.mxu0 0.0
    %2006 = vmatpush1.msra.mxu0 %v1975
    %2007 = vmatprep.subr.mxu0 0.0
    %2008 = vmatpush1.msra.mxu0 %v1976
    %2009 = vmatprep.subr.mxu0 0.0
    %2010 = vmatpush1.msra.mxu0 %v1977
    %2011 = vmatprep.subr.mxu0 0.0
    %2012 = vmatpush1.msra.mxu0 %v1978
    %2013 = vmatprep.subr.mxu0 0.0
    %2014 = vmatpush1.msra.mxu0 %v1979
    %2015 = vmatprep.subr.mxu0 0.0
    %2016 = vmatpush1.msra.mxu0 %v1980
    %2017 = vmatprep.subr.mxu0 0.0
    %2018 = vmatpush1.msra.mxu0 0.0
    %2019 = vmatprep.subr.mxu0 0.0
    %2020 = vmatpush1.msra.mxu0 0.0
    %2021 = vmatprep.subr.mxu0 0.0
    %2022 = vmatpush1.msra.mxu0 0.0
    %2023 = vmatprep.subr.mxu0 0.0
    %2024 = vmatpush1.msra.mxu0 0.0
    %2025 = vmatprep.subr.mxu0 0.0
    %2026 = vmatpush1.msra.mxu0 0.0
    %2027 = vmatprep.subr.mxu0 0.0
    %2028 = vmatpush1.msra.mxu0 0.0
    %2029 = vmatprep.subr.mxu0 0.0
    %2030 = vmatpush1.msra.mxu0 0.0
    %2031 = vmatprep.subr.mxu0 0.0
    %2032 = vmatpush1.msra.mxu0 0.0
    %2033 = vmatprep.subr.mxu0 0.0
    %2034 = vmatpush1.msra.mxu0 0.0
    %2035 = vmatprep.subr.mxu0 0.0
    %2036 = vmatpush1.msra.mxu0 0.0
    %2037 = vmatprep.subr.mxu0 0.0
    %2038 = vmatpush1.msra.mxu0 0.0
    %2039 = vmatprep.subr.mxu0 0.0
    %2040 = vmatpush1.msra.mxu0 0.0
    %2041 = vmatprep.subr.mxu0 0.0
    %2042 = vmatpush1.msra.mxu0 0.0
    %2043 = vmatprep.subr.mxu0 0.0
    %2044 = vmatpush1.msra.mxu0 0.0
    %2045 = vmatprep.subr.mxu0 0.0
    %2046 = vmatpush1.msra.mxu0 0.0
    %2047 = vmatprep.subr.mxu0 0.0
    %2048 = vmatpush1.msra.mxu0 0.0
    %2049 = vmatprep.mubr.f32.mxu0 0.0
    %2050 = vmatmul.mubr.f32.gmra.mrb[0].mxu0 %v1963
    %v2051 = vpop.f32.mrb[0].mxu0
    %v2052 = vadd.f32 %v1984, %v2051
    %v2053 = vpop.f32.mrb[0].mxu0
    %2054 = vmatprep.mubr.f32.mxu0 0.0
    %2055 = vmatmul.mubr.f32.gmra.mrb[0].mxu0 %v1964
    %v2056 = vpop.f32.mrb[0].mxu0
    %v2057 = vadd.f32 %v1984, %v2056
    %v2058 = vpop.f32.mrb[0].mxu0
    %2059 = vdwg.mxu0
    %v2060 = vadd.f32 %v1826, %v2052
    %v2061 = vadd.f32 %v1827, %v2057
    %2062 = vst.msk [vmem:[#allocation2] sm:$0xff] %vm37, %v2060
    %2063 = vst.msk [vmem:[#allocation2 + $0x8] sm:$0xff] %vm37, %v2061
    // Predicated region
    $region30: #{block_forward.1} parent=1 // pred_check
      _
    $region31: #{block_forward.1} parent=1 // pred_check_branch
      %2065 = sbr.rel (0) target = $region33
    $region32: #{block_forward.1} parent=1 // pred_region
      %s2067 = ssub.s32 256, 256
      %2068 = vsyncadd [#allocation3], %s2067
      %s2069 = sshll.u32 [#allocation2], 4
      %s2070 = int_to_ptr.vmem [resolvable:$true] %s2069
      %2075 = dma.vmem_to_hbm [thread:$0]  %s2070, 256, %s7, [#allocation3], 128, 128, 8
    $region33: #{block_forward.1} parent=1 // pred_fallthru
      _
    // Predicated region
    $region34: #{block_forward.1} parent=1 // pred_check
      _
    $region35: #{block_forward.1} parent=1 // pred_check_branch
      %2077 = sbr.rel (0) target = $region37
    $region36: #{block_forward.1} parent=1 // pred_region
      %2078 = dma.done [#allocation3], 256
    $region37: #{block_forward.1} parent=1 // pred_fallthru
      _
    %2079 = vsyncpa [#allocation3], 1

</llo_original>
